<compile_context>
chip_gen: v6e
topology: v6e:2x2x1
jax: 0.10.0
libtpu: 0.0.40
codegen_flags: <defaults>
</compile_context>

<pallas_src>
import functools

import jax
import jax.numpy as jnp
from jax.experimental import pallas as pl
from jax.experimental.pallas import tpu as pltpu

LEAKY_SLOPE = 0.01  # nn.LeakyReLU() default negative_slope


def _round_up(x, m):
    return (x + m - 1) // m * m


# ----------------------------------------------------------------------------
# Pallas kernel: tiled matmul, bf16 operands / f32 accumulate, fused input
# LeakyReLU (the activation of the previous layer).
# ----------------------------------------------------------------------------
def _matmul_kernel(a_ref, b_ref, o_ref, acc_ref, *, in_alpha):
    @pl.when(pl.program_id(2) == 0)
    def _():
        acc_ref[...] = jnp.zeros_like(acc_ref)

    a = a_ref[...]                                   # f32 block
    if in_alpha is not None:                         # static flag: fused LeakyReLU
        a = jnp.where(a >= 0.0, a, in_alpha * a)
    acc_ref[...] += jnp.dot(a.astype(jnp.bfloat16), b_ref[...],
                            preferred_element_type=jnp.float32)

    @pl.when(pl.program_id(2) == pl.num_programs(2) - 1)
    def _():
        o_ref[...] = acc_ref[...].astype(o_ref.dtype)


def pallas_matmul(a, b, *, in_alpha=None, tm_max=256, tn_max=512, tk_max=512):
    """leaky_relu(a) @ b  (activation optional), tiled Pallas TPU matmul."""
    M, K = a.shape
    K2, N = b.shape
    assert K == K2

    tm = min(tm_max, _round_up(M, 8))
    tn = min(tn_max, _round_up(N, 128))      # lane-dense output stores
    tk = min(tk_max, K)
    Mp, Np, Kp = _round_up(M, tm), _round_up(N, tn), _round_up(K, tk)

    a_p = a.astype(jnp.float32)
    if (Mp, Kp) != (M, K):
        a_p = jnp.pad(a_p, ((0, Mp - M), (0, Kp - K)))
    b_p = b.astype(jnp.bfloat16)             # bf16 MXU operands
    if (Kp, Np) != (K, N):
        b_p = jnp.pad(b_p, ((0, Kp - K), (0, Np - N)))

    grid = (Mp // tm, Np // tn, Kp // tk)
    kernel = functools.partial(_matmul_kernel, in_alpha=in_alpha)
    out = pl.pallas_call(
        kernel,
        out_shape=jax.ShapeDtypeStruct((Mp, Np), jnp.float32),
        grid=grid,
        in_specs=[
            pl.BlockSpec((tm, tk), lambda i, j, k: (i, k)),
            pl.BlockSpec((tk, tn), lambda i, j, k: (k, j)),
        ],
        out_specs=pl.BlockSpec((tm, tn), lambda i, j, k: (i, j)),
        scratch_shapes=[pltpu.VMEM((tm, tn), jnp.float32)],
        compiler_params=pltpu.CompilerParams(
            dimension_semantics=("parallel", "parallel", "arbitrary")),
        cost_estimate=pl.CostEstimate(
            flops=2 * Mp * Np * Kp,
            transcendentals=0,
            bytes_accessed=4 * Mp * Kp + 2 * Kp * Np + 4 * Mp * Np),
    )(a_p, b_p)

    if (Mp, Np) != (M, N):
        out = out[:M, :N]
    return out


def _ref_matmul(a, b, *, in_alpha=None):
    """Pure-JAX f32 reference for the kernel (same math, jnp.dot)."""
    if in_alpha is not None:
        a = jnp.where(a >= 0.0, a, in_alpha * a)
    return jnp.dot(a.astype(jnp.float32), b.astype(jnp.float32),
                   preferred_element_type=jnp.float32)


# ----------------------------------------------------------------------------
# ConvTranspose2d plumbing (tiny XLA glue around the matmul hot path)
# ----------------------------------------------------------------------------
def convt_weight_to_matmul(w):
    """PyTorch ConvTranspose2d weight (Cin, Cout, KH, KW) -> (Cin, KH*KW*Cout)."""
    cin, cout, kh, kw = w.shape
    return jnp.transpose(w, (0, 2, 3, 1)).reshape(cin, kh * kw * cout)


def col2im_stride2_k4_p1(y_all, B, H, W, cout):
    """Scatter-add per-tap matmul output of ConvTranspose2d(k=4, s=2, p=1)
    into the (B, 2H, 2W, cout) NHWC output (pure data re-arrangement)."""
    y = y_all.reshape(B, H, W, 4, 4, cout)
    yp = jnp.pad(y, ((0, 0), (1, 1), (1, 1), (0, 0), (0, 0), (0, 0)))
    # output row 2*i + r gathers kernel rows kh at input rows i + dh - 1:
    #   r = 0 : (dh, kh) in [(0, 3), (1, 1)]
    #   r = 1 : (dh, kh) in [(1, 2), (2, 0)]     (same for columns / kw)
    taps = ([(0, 3), (1, 1)], [(1, 2), (2, 0)])
    rows = []
    for r in range(2):
        cols = []
        for c in range(2):
            acc = jnp.zeros((B, H, W, cout), jnp.float32)
            for dh, kh in taps[r]:
                for dw, kw in taps[c]:
                    acc = acc + yp[:, dh:dh + H, dw:dw + W, kh, kw, :]
            cols.append(acc)
        rows.append(jnp.stack(cols, axis=3))        # (B, H, W, 2, cout)
    out = jnp.stack(rows, axis=2)                   # (B, H, 2, W, 2, cout)
    return out.reshape(B, 2 * H, 2 * W, cout)


# ----------------------------------------------------------------------------
# Model: parameters + forward (normalizers_list = [] -> Identity layers)
# ----------------------------------------------------------------------------
def init_params(key, latent_dim, channels_img, gen_features, num_classes,
                embedding_dim):
    k_emb, k1, k2, k3, k4 = jax.random.split(key, 5)
    cin0 = latent_dim + embedding_dim

    def w(k, cin, cout):
        # PyTorch ConvTranspose2d weight layout: (Cin, Cout, KH, KW), bias=False
        return jax.random.normal(k, (cin, cout, 4, 4), jnp.float32) * 0.05

    return {
        "embed": jax.random.normal(k_emb, (num_classes, embedding_dim),
                                   jnp.float32),
        "w1m": convt_weight_to_matmul(w(k1, cin0, gen_features * 8)),
        "w2m": convt_weight_to_matmul(w(k2, gen_features * 8, gen_features * 4)),
        "w3m": convt_weight_to_matmul(w(k3, gen_features * 4, gen_features * 2)),
        "w4m": convt_weight_to_matmul(w(k4, gen_features * 2, channels_img)),
    }


def generator_forward(params, noise, labels, matmul):
    """noise: (B, latent_dim, 1, 1) NCHW; labels: (B,) int.  Returns NCHW."""
    B = noise.shape[0]
    emb = params["embed"][labels]                                # (B, emb_dim)
    z = jnp.concatenate([noise.reshape(B, -1), emb], axis=1)     # cat on channels
    z = z.astype(jnp.float32)

    c1 = params["w1m"].shape[1] // 16
    c2 = params["w2m"].shape[1] // 16
    c3 = params["w3m"].shape[1] // 16
    ci = params["w4m"].shape[1] // 16

    # Layer 1: ConvTranspose2d(k=4, s=1, p=0) on a 1x1 map == plain matmul.
    h1 = matmul(z, params["w1m"], in_alpha=None).reshape(B, 4, 4, c1)

    # Layers 2-4: per-tap matmul (input not duplicated) + col2im scatter-add.
    # The previous layer's LeakyReLU is fused into the kernel (input side).
    y2 = matmul(h1.reshape(B * 16, c1), params["w2m"], in_alpha=LEAKY_SLOPE)
    h2 = col2im_stride2_k4_p1(y2, B, 4, 4, c2)                   # (B, 8, 8, c2)

    y3 = matmul(h2.reshape(B * 64, c2), params["w3m"], in_alpha=LEAKY_SLOPE)
    h3 = col2im_stride2_k4_p1(y3, B, 8, 8, c3)                   # (B, 16, 16, c3)

    y4 = matmul(h3.reshape(B * 256, c3), params["w4m"], in_alpha=LEAKY_SLOPE)
    h4 = col2im_stride2_k4_p1(y4, B, 16, 16, ci)                 # (B, 32, 32, ci)

    out = jnp.tanh(h4)
    return jnp.transpose(out, (0, 3, 1, 2))                      # NCHW


if __name__ == "__main__":
    # Small, shape-consistent config: output is (B, channels_img, 32, 32).
    B = 2
    latent_dim = 32
    embedding_dim = 16
    gen_features = 8
    channels_img = 3
    num_classes = 10

    key = jax.random.PRNGKey(0)
    kp, kn, kl = jax.random.split(key, 3)

    params = init_params(kp, latent_dim, channels_img, gen_features,
                         num_classes, embedding_dim)
    noise = jax.random.normal(kn, (B, latent_dim, 1, 1), jnp.float32)
    labels = jax.random.randint(kl, (B,), 0, num_classes, jnp.int32)

    fwd = jax.jit(functools.partial(generator_forward, matmul=pallas_matmul))
    out = jax.block_until_ready(fwd(params, noise, labels))

    assert out.shape == (B, channels_img, 32, 32), out.shape
    assert out.dtype == jnp.float32
    assert bool(jnp.all(jnp.isfinite(out)))

    # Pure-JAX f32 reference (same math, jnp.dot); loose tolerance because the
    # Pallas path feeds the MXU bf16 operands.
    ref = generator_forward(params, noise, labels, matmul=_ref_matmul)
    assert float(jnp.max(jnp.abs(out - ref))) < 0.1

    print("KERNEL_OK")
</pallas_src>

<mosaic_0001>
module attributes {stable_mosaic.version = 11 : i64} {
  func.func @_matmul_kernel(%arg0: i32, %arg1: i32, %arg2: i32, %arg3: memref<8x48xf32, #tpu.memory_space<vmem>>, %arg4: memref<48x512xbf16, #tpu.memory_space<vmem>>, %arg5: memref<8x512xf32, #tpu.memory_space<vmem>>, %arg6: memref<8x512xf32, #tpu.memory_space<vmem>>) attributes {dimension_semantics = [#tpu.dimension_semantics<parallel>, #tpu.dimension_semantics<parallel>, #tpu.dimension_semantics<arbitrary>], iteration_bounds = array<i64: 1, 2, 1>, scalar_prefetch = 0 : i64, scratch_operands = 1 : i64, tpu.core_type = #tpu.core_type<tc>, window_params = [{transform_indices = @transform_0, window_bounds = array<i64: 8, 48>}, {transform_indices = @transform_1, window_bounds = array<i64: 48, 512>}, {transform_indices = @transform_2, window_bounds = array<i64: 8, 512>}]} {
    %c0_i32 = arith.constant 0 : i32
    %0 = arith.cmpi eq, %arg2, %c0_i32 : i32
    %1 = arith.extui %0 : i1 to i32
    %c0_i32_0 = arith.constant 0 : i32
    %2 = arith.cmpi ne, %1, %c0_i32_0 : i32
    scf.if %2 {
      %cst_10 = arith.constant 0.000000e+00 : f32
      %13 = vector.broadcast %cst_10 : f32 to vector<8x512xf32>
      %c0_11 = arith.constant 0 : index
      %c0_12 = arith.constant 0 : index
      %14 = vector.load %arg6[%c0_11, %c0_12] : memref<8x512xf32, #tpu.memory_space<vmem>>, vector<8x512xf32>
      tpu.vector_store %arg6[%c0_11, %c0_12], %13 {strides = array<i32>} : memref<8x512xf32, #tpu.memory_space<vmem>>, vector<8x512xf32>,
    } else {
    }
    %c0 = arith.constant 0 : index
    %c0_1 = arith.constant 0 : index
    %3 = vector.load %arg3[%c0, %c0_1] : memref<8x48xf32, #tpu.memory_space<vmem>>, vector<8x48xf32>
    %c0_2 = arith.constant 0 : index
    %c0_3 = arith.constant 0 : index
    %4 = vector.load %arg6[%c0_2, %c0_3] : memref<8x512xf32, #tpu.memory_space<vmem>>, vector<8x512xf32>
    %5 = arith.truncf %3 : vector<8x48xf32> to vector<8x48xbf16>
    %c0_4 = arith.constant 0 : index
    %c0_5 = arith.constant 0 : index
    %6 = vector.load %arg4[%c0_4, %c0_5] : memref<48x512xbf16, #tpu.memory_space<vmem>>, vector<48x512xbf16>
    %cst = arith.constant dense<0.000000e+00> : vector<8x512xf32>
    %7 = tpu.matmul %5, %6, %cst {dimension_numbers = #tpu.dot_dimension_numbers<[1], [0], [0], [1], [0, 0, 1, 1], [], []>} : vector<8x48xbf16>, vector<48x512xbf16>, vector<8x512xf32> -> vector<8x512xf32>
    %8 = arith.addf %4, %7 : vector<8x512xf32>
    %c0_6 = arith.constant 0 : index
    %c0_7 = arith.constant 0 : index
    %9 = vector.load %arg6[%c0_6, %c0_7] : memref<8x512xf32, #tpu.memory_space<vmem>>, vector<8x512xf32>
    tpu.vector_store %arg6[%c0_6, %c0_7], %8 {strides = array<i32>} : memref<8x512xf32, #tpu.memory_space<vmem>>, vector<8x512xf32>,
    %c0_i32_8 = arith.constant 0 : i32
    %10 = arith.cmpi eq, %arg2, %c0_i32_8 : i32
    %11 = arith.extui %10 : i1 to i32
    %c0_i32_9 = arith.constant 0 : i32
    %12 = arith.cmpi ne, %11, %c0_i32_9 : i32
    scf.if %12 {
      %c0_10 = arith.constant 0 : index
      %c0_11 = arith.constant 0 : index
      %13 = vector.load %arg6[%c0_10, %c0_11] : memref<8x512xf32, #tpu.memory_space<vmem>>, vector<8x512xf32>
      %c0_12 = arith.constant 0 : index
      %c0_13 = arith.constant 0 : index
      %14 = vector.load %arg5[%c0_12, %c0_13] : memref<8x512xf32, #tpu.memory_space<vmem>>, vector<8x512xf32>
      tpu.vector_store %arg5[%c0_12, %c0_13], %13 {strides = array<i32>} : memref<8x512xf32, #tpu.memory_space<vmem>>, vector<8x512xf32>,
    } else {
    }
    return
  }
  func.func @transform_0(%arg0: i32, %arg1: i32, %arg2: i32) -> (i32, i32) {
    %c0_i32 = arith.constant 0 : i32
    return %arg0, %arg2 : i32, i32
  }
  func.func @transform_1(%arg0: i32, %arg1: i32, %arg2: i32) -> (i32, i32) {
    %c0_i32 = arith.constant 0 : i32
    return %arg2, %arg1 : i32, i32
  }
  func.func @transform_2(%arg0: i32, %arg1: i32, %arg2: i32) -> (i32, i32) {
    %c0_i32 = arith.constant 0 : i32
    return %arg0, %arg1 : i32, i32
  }
}

module attributes {stable_mosaic.version = 11 : i64} {
  func.func @_matmul_kernel(%arg0: i32, %arg1: i32, %arg2: i32, %arg3: memref<32x64xf32, #tpu.memory_space<vmem>>, %arg4: memref<64x512xbf16, #tpu.memory_space<vmem>>, %arg5: memref<32x512xf32, #tpu.memory_space<vmem>>, %arg6: memref<32x512xf32, #tpu.memory_space<vmem>>) attributes {dimension_semantics = [#tpu.dimension_semantics<parallel>, #tpu.dimension_semantics<parallel>, #tpu.dimension_semantics<arbitrary>], iteration_bounds = array<i64: 1, 1, 1>, scalar_prefetch = 0 : i64, scratch_operands = 1 : i64, tpu.core_type = #tpu.core_type<tc>, window_params = [{transform_indices = @transform_0, window_bounds = array<i64: 32, 64>}, {transform_indices = @transform_1, window_bounds = array<i64: 64, 512>}, {transform_indices = @transform_2, window_bounds = array<i64: 32, 512>}]} {
    %c0_i32 = arith.constant 0 : i32
    %0 = arith.cmpi eq, %arg2, %c0_i32 : i32
    %1 = arith.extui %0 : i1 to i32
    %c0_i32_0 = arith.constant 0 : i32
    %2 = arith.cmpi ne, %1, %c0_i32_0 : i32
    scf.if %2 {
      %cst_12 = arith.constant 0.000000e+00 : f32
      %18 = vector.broadcast %cst_12 : f32 to vector<32x512xf32>
      %c0_13 = arith.constant 0 : index
      %c0_14 = arith.constant 0 : index
      %19 = vector.load %arg6[%c0_13, %c0_14] : memref<32x512xf32, #tpu.memory_space<vmem>>, vector<32x512xf32>
      tpu.vector_store %arg6[%c0_13, %c0_14], %18 {strides = array<i32>} : memref<32x512xf32, #tpu.memory_space<vmem>>, vector<32x512xf32>,
    } else {
    }
    %c0 = arith.constant 0 : index
    %c0_1 = arith.constant 0 : index
    %3 = vector.load %arg3[%c0, %c0_1] : memref<32x64xf32, #tpu.memory_space<vmem>>, vector<32x64xf32>
    %cst = arith.constant 0.000000e+00 : f32
    %4 = vector.broadcast %cst : f32 to vector<32x64xf32>
    %5 = arith.cmpf oge, %3, %4 : vector<32x64xf32>
    %cst_2 = arith.constant 0.00999999977 : f32
    %6 = vector.broadcast %cst_2 : f32 to vector<32x64xf32>
    %7 = arith.mulf %6, %3 : vector<32x64xf32>
    %8 = arith.select %5, %3, %7 : vector<32x64xi1>, vector<32x64xf32>
    %c0_3 = arith.constant 0 : index
    %c0_4 = arith.constant 0 : index
    %9 = vector.load %arg6[%c0_3, %c0_4] : memref<32x512xf32, #tpu.memory_space<vmem>>, vector<32x512xf32>
    %10 = arith.truncf %8 : vector<32x64xf32> to vector<32x64xbf16>
    %c0_5 = arith.constant 0 : index
    %c0_6 = arith.constant 0 : index
    %11 = vector.load %arg4[%c0_5, %c0_6] : memref<64x512xbf16, #tpu.memory_space<vmem>>, vector<64x512xbf16>
    %cst_7 = arith.constant dense<0.000000e+00> : vector<32x512xf32>
    %12 = tpu.matmul %10, %11, %cst_7 {dimension_numbers = #tpu.dot_dimension_numbers<[1], [0], [0], [1], [0, 0, 1, 1], [], []>} : vector<32x64xbf16>, vector<64x512xbf16>, vector<32x512xf32> -> vector<32x512xf32>
    %13 = arith.addf %9, %12 : vector<32x512xf32>
    %c0_8 = arith.constant 0 : index
    %c0_9 = arith.constant 0 : index
    %14 = vector.load %arg6[%c0_8, %c0_9] : memref<32x512xf32, #tpu.memory_space<vmem>>, vector<32x512xf32>
    tpu.vector_store %arg6[%c0_8, %c0_9], %13 {strides = array<i32>} : memref<32x512xf32, #tpu.memory_space<vmem>>, vector<32x512xf32>,
    %c0_i32_10 = arith.constant 0 : i32
    %15 = arith.cmpi eq, %arg2, %c0_i32_10 : i32
    %16 = arith.extui %15 : i1 to i32
    %c0_i32_11 = arith.constant 0 : i32
    %17 = arith.cmpi ne, %16, %c0_i32_11 : i32
    scf.if %17 {
      %c0_12 = arith.constant 0 : index
      %c0_13 = arith.constant 0 : index
      %18 = vector.load %arg6[%c0_12, %c0_13] : memref<32x512xf32, #tpu.memory_space<vmem>>, vector<32x512xf32>
      %c0_14 = arith.constant 0 : index
      %c0_15 = arith.constant 0 : index
      %19 = vector.load %arg5[%c0_14, %c0_15] : memref<32x512xf32, #tpu.memory_space<vmem>>, vector<32x512xf32>
      tpu.vector_store %arg5[%c0_14, %c0_15], %18 {strides = array<i32>} : memref<32x512xf32, #tpu.memory_space<vmem>>, vector<32x512xf32>,
    } else {
    }
    return
  }
  func.func @transform_0(%arg0: i32, %arg1: i32, %arg2: i32) -> (i32, i32) {
    %c0_i32 = arith.constant 0 : i32
    return %arg0, %arg2 : i32, i32
  }
  func.func @transform_1(%arg0: i32, %arg1: i32, %arg2: i32) -> (i32, i32) {
    %c0_i32 = arith.constant 0 : i32
    return %arg2, %arg1 : i32, i32
  }
  func.func @transform_2(%arg0: i32, %arg1: i32, %arg2: i32) -> (i32, i32) {
    %c0_i32 = arith.constant 0 : i32
    return %arg0, %arg1 : i32, i32
  }
}

module attributes {stable_mosaic.version = 11 : i64} {
  func.func @_matmul_kernel(%arg0: i32, %arg1: i32, %arg2: i32, %arg3: memref<128x32xf32, #tpu.memory_space<vmem>>, %arg4: memref<32x256xbf16, #tpu.memory_space<vmem>>, %arg5: memref<128x256xf32, #tpu.memory_space<vmem>>, %arg6: memref<128x256xf32, #tpu.memory_space<vmem>>) attributes {dimension_semantics = [#tpu.dimension_semantics<parallel>, #tpu.dimension_semantics<parallel>, #tpu.dimension_semantics<arbitrary>], iteration_bounds = array<i64: 1, 1, 1>, scalar_prefetch = 0 : i64, scratch_operands = 1 : i64, tpu.core_type = #tpu.core_type<tc>, window_params = [{transform_indices = @transform_0, window_bounds = array<i64: 128, 32>}, {transform_indices = @transform_1, window_bounds = array<i64: 32, 256>}, {transform_indices = @transform_2, window_bounds = array<i64: 128, 256>}]} {
    %c0_i32 = arith.constant 0 : i32
    %0 = arith.cmpi eq, %arg2, %c0_i32 : i32
    %1 = arith.extui %0 : i1 to i32
    %c0_i32_0 = arith.constant 0 : i32
    %2 = arith.cmpi ne, %1, %c0_i32_0 : i32
    scf.if %2 {
      %cst_12 = arith.constant 0.000000e+00 : f32
      %18 = vector.broadcast %cst_12 : f32 to vector<128x256xf32>
      %c0_13 = arith.constant 0 : index
      %c0_14 = arith.constant 0 : index
      %19 = vector.load %arg6[%c0_13, %c0_14] : memref<128x256xf32, #tpu.memory_space<vmem>>, vector<128x256xf32>
      tpu.vector_store %arg6[%c0_13, %c0_14], %18 {strides = array<i32>} : memref<128x256xf32, #tpu.memory_space<vmem>>, vector<128x256xf32>,
    } else {
    }
    %c0 = arith.constant 0 : index
    %c0_1 = arith.constant 0 : index
    %3 = vector.load %arg3[%c0, %c0_1] : memref<128x32xf32, #tpu.memory_space<vmem>>, vector<128x32xf32>
    %cst = arith.constant 0.000000e+00 : f32
    %4 = vector.broadcast %cst : f32 to vector<128x32xf32>
    %5 = arith.cmpf oge, %3, %4 : vector<128x32xf32>
    %cst_2 = arith.constant 0.00999999977 : f32
    %6 = vector.broadcast %cst_2 : f32 to vector<128x32xf32>
    %7 = arith.mulf %6, %3 : vector<128x32xf32>
    %8 = arith.select %5, %3, %7 : vector<128x32xi1>, vector<128x32xf32>
    %c0_3 = arith.constant 0 : index
    %c0_4 = arith.constant 0 : index
    %9 = vector.load %arg6[%c0_3, %c0_4] : memref<128x256xf32, #tpu.memory_space<vmem>>, vector<128x256xf32>
    %10 = arith.truncf %8 : vector<128x32xf32> to vector<128x32xbf16>
    %c0_5 = arith.constant 0 : index
    %c0_6 = arith.constant 0 : index
    %11 = vector.load %arg4[%c0_5, %c0_6] : memref<32x256xbf16, #tpu.memory_space<vmem>>, vector<32x256xbf16>
    %cst_7 = arith.constant dense<0.000000e+00> : vector<128x256xf32>
    %12 = tpu.matmul %10, %11, %cst_7 {dimension_numbers = #tpu.dot_dimension_numbers<[1], [0], [0], [1], [0, 0, 1, 1], [], []>} : vector<128x32xbf16>, vector<32x256xbf16>, vector<128x256xf32> -> vector<128x256xf32>
    %13 = arith.addf %9, %12 : vector<128x256xf32>
    %c0_8 = arith.constant 0 : index
    %c0_9 = arith.constant 0 : index
    %14 = vector.load %arg6[%c0_8, %c0_9] : memref<128x256xf32, #tpu.memory_space<vmem>>, vector<128x256xf32>
    tpu.vector_store %arg6[%c0_8, %c0_9], %13 {strides = array<i32>} : memref<128x256xf32, #tpu.memory_space<vmem>>, vector<128x256xf32>,
    %c0_i32_10 = arith.constant 0 : i32
    %15 = arith.cmpi eq, %arg2, %c0_i32_10 : i32
    %16 = arith.extui %15 : i1 to i32
    %c0_i32_11 = arith.constant 0 : i32
    %17 = arith.cmpi ne, %16, %c0_i32_11 : i32
    scf.if %17 {
      %c0_12 = arith.constant 0 : index
      %c0_13 = arith.constant 0 : index
      %18 = vector.load %arg6[%c0_12, %c0_13] : memref<128x256xf32, #tpu.memory_space<vmem>>, vector<128x256xf32>
      %c0_14 = arith.constant 0 : index
      %c0_15 = arith.constant 0 : index
      %19 = vector.load %arg5[%c0_14, %c0_15] : memref<128x256xf32, #tpu.memory_space<vmem>>, vector<128x256xf32>
      tpu.vector_store %arg5[%c0_14, %c0_15], %18 {strides = array<i32>} : memref<128x256xf32, #tpu.memory_space<vmem>>, vector<128x256xf32>,
    } else {
    }
    return
  }
  func.func @transform_0(%arg0: i32, %arg1: i32, %arg2: i32) -> (i32, i32) {
    %c0_i32 = arith.constant 0 : i32
    return %arg0, %arg2 : i32, i32
  }
  func.func @transform_1(%arg0: i32, %arg1: i32, %arg2: i32) -> (i32, i32) {
    %c0_i32 = arith.constant 0 : i32
    return %arg2, %arg1 : i32, i32
  }
  func.func @transform_2(%arg0: i32, %arg1: i32, %arg2: i32) -> (i32, i32) {
    %c0_i32 = arith.constant 0 : i32
    return %arg0, %arg1 : i32, i32
  }
}

module attributes {stable_mosaic.version = 11 : i64} {
  func.func @_matmul_kernel(%arg0: i32, %arg1: i32, %arg2: i32, %arg3: memref<256x16xf32, #tpu.memory_space<vmem>>, %arg4: memref<16x128xbf16, #tpu.memory_space<vmem>>, %arg5: memref<256x128xf32, #tpu.memory_space<vmem>>, %arg6: memref<256x128xf32, #tpu.memory_space<vmem>>) attributes {dimension_semantics = [#tpu.dimension_semantics<parallel>, #tpu.dimension_semantics<parallel>, #tpu.dimension_semantics<arbitrary>], iteration_bounds = array<i64: 2, 1, 1>, scalar_prefetch = 0 : i64, scratch_operands = 1 : i64, tpu.core_type = #tpu.core_type<tc>, window_params = [{transform_indices = @transform_0, window_bounds = array<i64: 256, 16>}, {transform_indices = @transform_1, window_bounds = array<i64: 16, 128>}, {transform_indices = @transform_2, window_bounds = array<i64: 256, 128>}]} {
    %c0_i32 = arith.constant 0 : i32
    %0 = arith.cmpi eq, %arg2, %c0_i32 : i32
    %1 = arith.extui %0 : i1 to i32
    %c0_i32_0 = arith.constant 0 : i32
    %2 = arith.cmpi ne, %1, %c0_i32_0 : i32
    scf.if %2 {
      %cst_12 = arith.constant 0.000000e+00 : f32
      %18 = vector.broadcast %cst_12 : f32 to vector<256x128xf32>
      %c0_13 = arith.constant 0 : index
      %c0_14 = arith.constant 0 : index
      %19 = vector.load %arg6[%c0_13, %c0_14] : memref<256x128xf32, #tpu.memory_space<vmem>>, vector<256x128xf32>
      tpu.vector_store %arg6[%c0_13, %c0_14], %18 {strides = array<i32>} : memref<256x128xf32, #tpu.memory_space<vmem>>, vector<256x128xf32>,
    } else {
    }
    %c0 = arith.constant 0 : index
    %c0_1 = arith.constant 0 : index
    %3 = vector.load %arg3[%c0, %c0_1] : memref<256x16xf32, #tpu.memory_space<vmem>>, vector<256x16xf32>
    %cst = arith.constant 0.000000e+00 : f32
    %4 = vector.broadcast %cst : f32 to vector<256x16xf32>
    %5 = arith.cmpf oge, %3, %4 : vector<256x16xf32>
    %cst_2 = arith.constant 0.00999999977 : f32
    %6 = vector.broadcast %cst_2 : f32 to vector<256x16xf32>
    %7 = arith.mulf %6, %3 : vector<256x16xf32>
    %8 = arith.select %5, %3, %7 : vector<256x16xi1>, vector<256x16xf32>
    %c0_3 = arith.constant 0 : index
    %c0_4 = arith.constant 0 : index
    %9 = vector.load %arg6[%c0_3, %c0_4] : memref<256x128xf32, #tpu.memory_space<vmem>>, vector<256x128xf32>
    %10 = arith.truncf %8 : vector<256x16xf32> to vector<256x16xbf16>
    %c0_5 = arith.constant 0 : index
    %c0_6 = arith.constant 0 : index
    %11 = vector.load %arg4[%c0_5, %c0_6] : memref<16x128xbf16, #tpu.memory_space<vmem>>, vector<16x128xbf16>
    %cst_7 = arith.constant dense<0.000000e+00> : vector<256x128xf32>
    %12 = tpu.matmul %10, %11, %cst_7 {dimension_numbers = #tpu.dot_dimension_numbers<[1], [0], [0], [1], [0, 0, 1, 1], [], []>} : vector<256x16xbf16>, vector<16x128xbf16>, vector<256x128xf32> -> vector<256x128xf32>
    %13 = arith.addf %9, %12 : vector<256x128xf32>
    %c0_8 = arith.constant 0 : index
    %c0_9 = arith.constant 0 : index
    %14 = vector.load %arg6[%c0_8, %c0_9] : memref<256x128xf32, #tpu.memory_space<vmem>>, vector<256x128xf32>
    tpu.vector_store %arg6[%c0_8, %c0_9], %13 {strides = array<i32>} : memref<256x128xf32, #tpu.memory_space<vmem>>, vector<256x128xf32>,
    %c0_i32_10 = arith.constant 0 : i32
    %15 = arith.cmpi eq, %arg2, %c0_i32_10 : i32
    %16 = arith.extui %15 : i1 to i32
    %c0_i32_11 = arith.constant 0 : i32
    %17 = arith.cmpi ne, %16, %c0_i32_11 : i32
    scf.if %17 {
      %c0_12 = arith.constant 0 : index
      %c0_13 = arith.constant 0 : index
      %18 = vector.load %arg6[%c0_12, %c0_13] : memref<256x128xf32, #tpu.memory_space<vmem>>, vector<256x128xf32>
      %c0_14 = arith.constant 0 : index
      %c0_15 = arith.constant 0 : index
      %19 = vector.load %arg5[%c0_14, %c0_15] : memref<256x128xf32, #tpu.memory_space<vmem>>, vector<256x128xf32>
      tpu.vector_store %arg5[%c0_14, %c0_15], %18 {strides = array<i32>} : memref<256x128xf32, #tpu.memory_space<vmem>>, vector<256x128xf32>,
    } else {
    }
    return
  }
  func.func @transform_0(%arg0: i32, %arg1: i32, %arg2: i32) -> (i32, i32) {
    %c0_i32 = arith.constant 0 : i32
    return %arg0, %arg2 : i32, i32
  }
  func.func @transform_1(%arg0: i32, %arg1: i32, %arg2: i32) -> (i32, i32) {
    %c0_i32 = arith.constant 0 : i32
    return %arg2, %arg1 : i32, i32
  }
  func.func @transform_2(%arg0: i32, %arg1: i32, %arg2: i32) -> (i32, i32) {
    %c0_i32 = arith.constant 0 : i32
    return %arg0, %arg1 : i32, i32
  }
}

</mosaic_0001>

<llo_original>
// kernel: generator_forward.4
$region0: #{generator_forward.4}
  #allocation0 [shape = 'u32[]', space=smem, size = 0x4, offset = 0x4, fixed_abs, tag = 'smem constant byte address 0x4 - core index']
  #allocation1 [shape = 'u32[144,128]{1,0:T(1,128)}', space=vmem, size = 0x12000, scoped, tag = 'internal scratch']
  #allocation2 [shape = 'f32[8,512]{1,0:T(8,128)}', space=vmem, size = 0x4000, scoped, tag = 'scratch operand']
  %s0 = inlined_call_operand.vmem [shape: f32[8,48], index: 0, kind: input, shape index: {}]
  %s1 = inlined_call_operand.vmem [shape: bf16[48,1024], index: 1, kind: input, shape index: {}]
  %s2 = inlined_call_operand.vmem [shape: f32[8,1024], index: 2, kind: output, shape index: {}]
  %s3 = sld [smem:[#allocation0]]
  $region72: #{generator_forward.4} parent=0
    _
  %s5 = ssub.s32 1, %s3
  %s6 = scalar_select 0, %s5, %s3
  $region1: #{generator_forward.4} parent=0
    #allocation3 [shape = 'u8[98304]{0}', space=vmem, size = 0x18000, scoped, tag = 'input window, operand 1']
    loop: start=0, step=1, limit=4
    $region2: #{generator_forward.4} parent=1 // loop_pre_header
      _
    $region3: #{generator_forward.4} parent=1 // loop_header
      %s8 = sphi 0, %s12
      %p9 = scmp.ge.s32.totalorder %s8, 4
      %s15 = sphi 0, %s34
      %s16 = sphi 0, %s30
      %s17 = sphi 0, %s26
      %s18 = sphi 0, %s15
      %s19 = sphi 0, %s16
      %s20 = sphi 0, %s17
      %s21 = sphi 0, %s18
      %s22 = sphi 0, %s19
      %s23 = sphi 0, %s20
      %s39 = sphi 0, %s41
      %s42 = sphi 0, %s39
      %s43 = sphi 0, %s42
      %s59 = sphi 0, %s43
      %s67 = sphi 0, %s69
      %s70 = sphi 0, %s67
      %s71 = sphi 0, %s70
      %s87 = sphi 0, %s71
      %s95 = sphi 0, %s97
      %s98 = sphi 0, %s95
      %s99 = sphi 0, %s98
      %s115 = sphi 0, %s99
    $region4: #{generator_forward.4} parent=1 // loop_header_branch
      %11 = sbr.rel (%p9) target = $region8
    $region5: #{generator_forward.4} parent=1 // loop_body
      %s13 = ssub.s32 %s8, 1
      %s14 = ssub.s32 %s8, 2
      %s24 = sadd.s32 1, %s17
      %p25 = scmp.ge.s32.totalorder %s24, 1
      %s26 = scalar_select %p25, 0, %s24
      %s27 = sadd.s32 1, %s16
      %s28 = scalar_select %p25, %s27, %s16
      %p29 = scmp.ge.s32.totalorder %s28, 2
      %s30 = scalar_select %p29, 0, %s28
      %s31 = sadd.s32 1, %s15
      %s32 = scalar_select %p29, %s31, %s15
      %p33 = scmp.ge.s32.totalorder %s32, 1
      %s34 = scalar_select %p33, 0, %s32
      %s35 = ssub.s32 %s15, %s34
      %s36 = ssub.s32 %s17, %s26
      %s37 = sor.u32 %s35, %s36
      %p38 = scmp.eq.s32.totalorder %s37, 0
      %s40 = sadd.s32 %s39, 1
      %s41 = scalar_select %p38, %s39, %s40
      %p44 = pneg %p38
      %p45 = scmp.eq.s32.totalorder %s8, 1
      %p46 = por %p44, %p45
      %p47 = scmp.ne.s32.totalorder %s39, %s42
      %p48 = scmp.eq.s32.totalorder %s8, 0
      %p49 = por %p47, %p48
      %p50 = scmp.ne.s32.totalorder %s39, %s42
      %p51 = scmp.eq.s32.totalorder %s13, 1
      %p52 = por %p50, %p51
      %p53 = scmp.ne.s32.totalorder %s42, %s43
      %p54 = scmp.eq.s32.totalorder %s13, 0
      %p55 = por %p53, %p54
      %p56 = scmp.ne.s32.totalorder %s42, %s43
      %p57 = scmp.eq.s32.totalorder %s14, 1
      %p58 = por %p56, %p57
      %p60 = scmp.ne.s32.totalorder %s43, %s59
      %p61 = scmp.eq.s32.totalorder %s14, 0
      %p62 = por %p60, %p61
      %s63 = ssub.s32 %s17, %s26
      %s64 = ssub.s32 %s16, %s30
      %s65 = sor.u32 %s63, %s64
      %p66 = scmp.eq.s32.totalorder %s65, 0
      %s68 = sadd.s32 %s67, 1
      %s69 = scalar_select %p66, %s67, %s68
      %p72 = pneg %p66
      %p73 = scmp.eq.s32.totalorder %s8, 1
      %p74 = por %p72, %p73
      %p75 = scmp.ne.s32.totalorder %s67, %s70
      %p76 = scmp.eq.s32.totalorder %s8, 0
      %p77 = por %p75, %p76
      %p78 = scmp.ne.s32.totalorder %s67, %s70
      %p79 = scmp.eq.s32.totalorder %s13, 1
      %p80 = por %p78, %p79
      %p81 = scmp.ne.s32.totalorder %s70, %s71
      %p82 = scmp.eq.s32.totalorder %s13, 0
      %p83 = por %p81, %p82
      %p84 = scmp.ne.s32.totalorder %s70, %s71
      %p85 = scmp.eq.s32.totalorder %s14, 1
      %p86 = por %p84, %p85
      %p88 = scmp.ne.s32.totalorder %s71, %s87
      %p89 = scmp.eq.s32.totalorder %s14, 0
      %p90 = por %p88, %p89
      %s91 = ssub.s32 %s15, %s34
      %s92 = ssub.s32 %s16, %s30
      %s93 = sor.u32 %s91, %s92
      %p94 = scmp.eq.s32.totalorder %s93, 0
      %s96 = sadd.s32 %s95, 1
      %s97 = scalar_select %p94, %s95, %s96
      %p100 = pneg %p94
      %p101 = scmp.eq.s32.totalorder %s8, 1
      %p102 = por %p100, %p101
      %p103 = scmp.ne.s32.totalorder %s95, %s98
      %p104 = scmp.eq.s32.totalorder %s8, 0
      %p105 = por %p103, %p104
      %p106 = scmp.ne.s32.totalorder %s95, %s98
      %p107 = scmp.eq.s32.totalorder %s13, 1
      %p108 = por %p106, %p107
      %p109 = scmp.ne.s32.totalorder %s98, %s99
      %p110 = scmp.eq.s32.totalorder %s13, 0
      %p111 = por %p109, %p110
      %p112 = scmp.ne.s32.totalorder %s98, %s99
      %p113 = scmp.eq.s32.totalorder %s14, 1
      %p114 = por %p112, %p113
      %p116 = scmp.ne.s32.totalorder %s99, %s115
      %p117 = scmp.eq.s32.totalorder %s14, 0
      %p118 = por %p116, %p117
      %p119 = scmp.le.s32.totalorder 1, %s8
      %p120 = scmp.lt.s32.totalorder %s8, 3
      %p121 = pnand %p119, %p120
      %p122 = pneg %p121
      // Predicated region
      $region9: #{generator_forward.4} parent=5 // pred_check
        _
      $region10: #{generator_forward.4} parent=5 // pred_check_branch
        %124 = sbr.rel (%p121) target = $region12
      $region11: #{generator_forward.4} parent=5 // pred_region
        %s125 = ssub.s32 %s8, 1
        // Predicated region
        $region13: #{generator_forward.4} parent=11 // pred_check
          %p126 = pneg %p55
        $region14: #{generator_forward.4} parent=11 // pred_check_branch
          %128 = sbr.rel (%p126) target = $region16
        $region15: #{generator_forward.4} parent=11 // pred_region
          %p129 = scmp.lt.s32.totalorder %s18, 0
          %s130 = scalar_select %p129, %s18, 0
          %p131 = scmp.lt.s32.totalorder %s20, 0
          %s132 = scalar_select %p131, %s20, 0
          %s133 = sadd.s32 %s132, %s130
          %s134 = smul.addr %s133, 8
          %s135 = scalar_lea.vmem %s0, %s134
        $region16: #{generator_forward.4} parent=11 // pred_fallthru
          _
      $region12: #{generator_forward.4} parent=5 // pred_fallthru
        _
      %p136 = scmp.lt.s32.totalorder %s8, 2
      // Predicated region
      $region17: #{generator_forward.4} parent=5 // pred_check
        %p137 = pneg %p136
      $region18: #{generator_forward.4} parent=5 // pred_check_branch
        %139 = sbr.rel (%p137) target = $region20
      $region19: #{generator_forward.4} parent=5 // pred_region
        // Predicated region
        $region21: #{generator_forward.4} parent=19 // pred_check
          %p140 = pneg %p77
        $region22: #{generator_forward.4} parent=19 // pred_check_branch
          %142 = sbr.rel (%p140) target = $region24
        $region23: #{generator_forward.4} parent=19 // pred_region
          %s143 = sand.u32 %s67, 1
          %s144 = sand.u32 %s67, 1
          %s145 = smul.addr %s144, 96
          %s146 = scalar_lea.vmem [#allocation3], %s145
          %s147 = smul.u32 6, %s17
          %s148 = smul.u32 4, %s16
          %s149 = smul.addr %s147, 8
          %s150 = sadd.s32 %s148, %s149
          %s151 = smul.addr %s150, 4
          %s152 = scalar_lea.vmem %s1, %s151
          // Predicated region
          $region25: #{generator_forward.4} parent=23 // pred_check
            _
          $region26: #{generator_forward.4} parent=23 // pred_check_branch
            %154 = sbr.rel (0) target = $region28
          $region27: #{generator_forward.4} parent=23 // pred_region
            // Predicated region
            $region29: #{generator_forward.4} parent=27 // pred_check
              _
            $region30: #{generator_forward.4} parent=27 // pred_check_branch
              %156 = sbr.rel (0) target = $region32
            $region31: #{generator_forward.4} parent=27 // pred_region
              loop: start=0, step=1, limit=1
              $region33: #{generator_forward.4} parent=31 // loop_pre_header
                _
              $region34: #{generator_forward.4} parent=31 // loop_header
                %s158 = sphi 0, %s162
                %p159 = scmp.ge.s32.totalorder %s158, 1
                %s163 = sphi %s152, %s152
                %s164 = sphi %s146, %s146
              $region35: #{generator_forward.4} parent=31 // loop_header_branch
                %161 = sbr.rel (%p159) target = $region39
              $region36: #{generator_forward.4} parent=31 // loop_body
                %v165 = vld [vmem:[%s163] sm:$0xff]
                %166 = vst [vmem:[%s164] sm:$0xff] %v165
                %v167 = vld [vmem:[%s163 + $0x8] sm:$0xff]
                %168 = vst [vmem:[%s164 + $0x8] sm:$0xff] %v167
                %v169 = vld [vmem:[%s163 + $0x20] sm:$0xff]
                %170 = vst [vmem:[%s164 + $0x10] sm:$0xff] %v169
                %v171 = vld [vmem:[%s163 + $0x28] sm:$0xff]
                %172 = vst [vmem:[%s164 + $0x18] sm:$0xff] %v171
                %v173 = vld [vmem:[%s163 + $0x40] sm:$0xff]
                %174 = vst [vmem:[%s164 + $0x20] sm:$0xff] %v173
                %v175 = vld [vmem:[%s163 + $0x48] sm:$0xff]
                %176 = vst [vmem:[%s164 + $0x28] sm:$0xff] %v175
                %v177 = vld [vmem:[%s163 + $0x60] sm:$0xff]
                %178 = vst [vmem:[%s164 + $0x30] sm:$0xff] %v177
                %v179 = vld [vmem:[%s163 + $0x68] sm:$0xff]
                %180 = vst [vmem:[%s164 + $0x38] sm:$0xff] %v179
                %v181 = vld [vmem:[%s163 + $0x80] sm:$0xff]
                %182 = vst [vmem:[%s164 + $0x40] sm:$0xff] %v181
                %v183 = vld [vmem:[%s163 + $0x88] sm:$0xff]
                %184 = vst [vmem:[%s164 + $0x48] sm:$0xff] %v183
                %v185 = vld [vmem:[%s163 + $0xa0] sm:$0xff]
                %186 = vst [vmem:[%s164 + $0x50] sm:$0xff] %v185
                %v187 = vld [vmem:[%s163 + $0xa8] sm:$0xff]
                %188 = vst [vmem:[%s164 + $0x58] sm:$0xff] %v187
              $region37: #{generator_forward.4} parent=31 // loop_footer
                %s162 = sadd.s32 1, %s158
              $region38: #{generator_forward.4} parent=31 // loop_footer_branch
                %157 = sbr.rel target = $region34
              $region39: #{generator_forward.4} parent=31 // loop_exit
                _
            $region32: #{generator_forward.4} parent=27 // pred_fallthru
              _
            // Predicated region
            $region40: #{generator_forward.4} parent=27 // pred_check
              _
            $region41: #{generator_forward.4} parent=27 // pred_check_branch
              %190 = sbr.rel target = $region43
            $region42: #{generator_forward.4} parent=27 // pred_region
              _
            $region43: #{generator_forward.4} parent=27 // pred_fallthru
              _
          $region28: #{generator_forward.4} parent=23 // pred_fallthru
            _
          %191 = vnop
        $region24: #{generator_forward.4} parent=19 // pred_fallthru
          _
      $region20: #{generator_forward.4} parent=5 // pred_fallthru
        _
      %p192 = scmp.le.s32.totalorder 1, %s8
      %p193 = scmp.lt.s32.totalorder %s8, 3
      %p194 = pnand %p192, %p193
      %p195 = pneg %p194
      // Predicated region
      $region44: #{generator_forward.4} parent=5 // pred_check
        _
      $region45: #{generator_forward.4} parent=5 // pred_check_branch
        %197 = sbr.rel (%p194) target = $region47
      $region46: #{generator_forward.4} parent=5 // pred_region
        %s198 = ssub.s32 %s8, 1
        %s199 = sand.u32 %s70, 1
        %s200 = sand.u32 %s70, 1
        %s201 = smul.addr %s200, 96
        %s202 = scalar_lea.vmem [#allocation3], %s201
        // Predicated region
        $region48: #{generator_forward.4} parent=46 // pred_check
          %p203 = pneg %p83
        $region49: #{generator_forward.4} parent=46 // pred_check_branch
          %205 = sbr.rel (%p203) target = $region51
        $region50: #{generator_forward.4} parent=46 // pred_region
          _
        $region51: #{generator_forward.4} parent=46 // pred_fallthru
          _
        %p206 = scmp.lt.s32.totalorder %s18, 0
        %s207 = scalar_select %p206, %s18, 0
        %p208 = scmp.lt.s32.totalorder %s20, 0
        %s209 = scalar_select %p208, %s20, 0
        %s210 = sadd.s32 %s209, %s207
        %s211 = smul.addr %s210, 8
        %s212 = scalar_lea.vmem %s0, %s211
        %p213 = pneg %p55
        %p214 = pneg %p52
        %s215 = sand.u32 %s70, 1
        %s216 = sand.u32 %s70, 1
        %s217 = smul.addr %s216, 96
        %s218 = scalar_lea.vmem [#allocation3], %s217
        %p219 = pneg %p83
        %p220 = pneg %p80
        %p221 = pneg %p111
        %p222 = pneg %p108
        %s223 = smul.u32 4, %s19
        %p224 = scmp.lt.s32.totalorder %s18, 0
        %s225 = scalar_select %p224, %s18, 0
        %p226 = scmp.lt.s32.totalorder %s223, 7
        %s227 = scalar_select %p226, %s223, 7
        %s228 = smul.addr %s225, 8
        %s229 = sadd.s32 %s227, %s228
        %s230 = smul.addr %s229, 8
        %s231 = scalar_lea.vmem %s2, %s230
        %p232 = scmp.lt.s32.totalorder %s18, 0
        %s233 = scalar_select %p232, %s18, 0
        %p234 = scmp.lt.s32.totalorder %s20, 0
        %s235 = scalar_select %p234, %s20, 0
        %s236 = sadd.s32 %s235, %s233
        %s237 = smul.addr %s236, 8
        %s238 = scalar_lea.vmem %s0, %s237
        %s239 = smul.u32 6, %s20
        %s240 = smul.u32 4, %s19
        %s241 = smul.u32 4, %s19
        %p242 = scmp.lt.s32.totalorder %s18, 0
        %s243 = scalar_select %p242, %s18, 0
        %p244 = scmp.lt.s32.totalorder %s241, 7
        %s245 = scalar_select %p244, %s241, 7
        %s246 = smul.addr %s243, 8
        %s247 = sadd.s32 %s245, %s246
        %s248 = smul.addr %s247, 8
        %s249 = scalar_lea.vmem %s2, %s248
        %s250 = smul.u32 4, %s19
        %p252 = scmp.eq.s32.totalorder %s20, 0
        // Predicated region
        $region52: #{generator_forward.4} parent=46 // pred_check
          %p253 = pneg %p252
        $region53: #{generator_forward.4} parent=46 // pred_check_branch
          %255 = sbr.rel (%p253) target = $region55
        $region54: #{generator_forward.4} parent=46 // pred_region
          %256 = vst [vmem:[#allocation2] sm:$0xff] 0.0
          %257 = vst [vmem:[#allocation2 + $0x8] sm:$0xff] 0.0
          %258 = vst [vmem:[#allocation2 + $0x10] sm:$0xff] 0.0
          %259 = vst [vmem:[#allocation2 + $0x18] sm:$0xff] 0.0
        $region55: #{generator_forward.4} parent=46 // pred_fallthru
          _
        %v260 = vld [vmem:[%s238] sm:$0xff]
        %v261 = vld [vmem:[#allocation2] sm:$0xff]
        %v262 = vld [vmem:[#allocation2 + $0x8] sm:$0xff]
        %v263 = vld [vmem:[#allocation2 + $0x10] sm:$0xff]
        %v264 = vld [vmem:[#allocation2 + $0x18] sm:$0xff]
        %v265 = vpack.c.bf16 %v260, %v260
        %v266 = vld [vmem:[%s202] sm:$0xff]
        %v267 = vld [vmem:[%s202 + $0x8] sm:$0xff]
        %v268 = vld [vmem:[%s202 + $0x10] sm:$0xff]
        %v269 = vld [vmem:[%s202 + $0x18] sm:$0xff]
        %v270 = vld [vmem:[%s202 + $0x20] sm:$0xff]
        %v271 = vld [vmem:[%s202 + $0x28] sm:$0xff]
        %v272 = vld [vmem:[%s202 + $0x30] sm:$0xff]
        %v273 = vld [vmem:[%s202 + $0x38] sm:$0xff]
        %v274 = vld [vmem:[%s202 + $0x40] sm:$0xff]
        %v275 = vld [vmem:[%s202 + $0x48] sm:$0xff]
        %v276 = vld [vmem:[%s202 + $0x50] sm:$0xff]
        %v277 = vld [vmem:[%s202 + $0x58] sm:$0xff]
        %v290 = vunpack.c.l.b16 %v266
        %v291 = vunpack.c.h.b16 %v266
        %v292 = vunpack.c.l.b16 %v267
        %v293 = vunpack.c.h.b16 %v267
        %v294 = vunpack.c.l.b16 %v268
        %v295 = vunpack.c.h.b16 %v268
        %v296 = vunpack.c.l.b16 %v269
        %v297 = vunpack.c.h.b16 %v269
        %v298 = vunpack.c.l.b16 %v270
        %v299 = vunpack.c.h.b16 %v270
        %v300 = vunpack.c.l.b16 %v271
        %v301 = vunpack.c.h.b16 %v271
        %v302 = vunpack.c.l.b16 %v272
        %v303 = vunpack.c.h.b16 %v272
        %v304 = vunpack.c.l.b16 %v273
        %v305 = vunpack.c.h.b16 %v273
        %v306 = vunpack.c.l.b16 %v274
        %v307 = vunpack.c.h.b16 %v274
        %v308 = vunpack.c.l.b16 %v275
        %v309 = vunpack.c.h.b16 %v275
        %v310 = vunpack.c.l.b16 %v276
        %v311 = vunpack.c.h.b16 %v276
        %v312 = vunpack.c.l.b16 %v277
        %v313 = vunpack.c.h.b16 %v277
        %v314 = vpack.c.b16 %v294, %v290
        %v315 = vpack.c.b16 %v295, %v291
        %v316 = vpack.c.b16 %v296, %v292
        %v317 = vpack.c.b16 %v297, %v293
        %v318 = vpack.c.b16 %v302, %v298
        %v319 = vpack.c.b16 %v303, %v299
        %v320 = vpack.c.b16 %v304, %v300
        %v321 = vpack.c.b16 %v305, %v301
        %v322 = vpack.c.b16 %v310, %v306
        %v323 = vpack.c.b16 %v311, %v307
        %v324 = vpack.c.b16 %v312, %v308
        %v325 = vpack.c.b16 %v313, %v309
        %vm338 = vcmask 392192
        %v340 = vsel %vm338, %v265, 0
        %342 = vmatprep.subr.bf16.mxu0 0
        %343 = vmatpush1.bf16.msra.mxu0 0
        %344 = vmatprep.subr.bf16.mxu0 0
        %345 = vmatpush1.bf16.msra.mxu0 0
        %346 = vmatprep.subr.bf16.mxu0 0
        %347 = vmatpush1.bf16.msra.mxu0 0
        %348 = vmatprep.subr.bf16.mxu0 0
        %349 = vmatpush1.bf16.msra.mxu0 0
        %350 = vmatprep.subr.bf16.mxu0 0
        %351 = vmatpush1.bf16.msra.mxu0 0
        %352 = vmatprep.subr.bf16.mxu0 %v323
        %353 = vmatpush1.bf16.msra.mxu0 %v322
        %354 = vmatprep.subr.bf16.mxu0 %v319
        %355 = vmatpush1.bf16.msra.mxu0 %v318
        %356 = vmatprep.subr.bf16.mxu0 %v315
        %357 = vmatpush1.bf16.msra.mxu0 %v314
        %358 = vmatprep.subr.bf16.mxu0 0
        %359 = vmatpush2.bf16.msra.mxu0 0
        %360 = vmatprep.subr.bf16.mxu0 0
        %361 = vmatpush2.bf16.msra.mxu0 0
        %362 = vmatprep.subr.bf16.mxu0 0
        %363 = vmatpush2.bf16.msra.mxu0 0
        %364 = vmatprep.subr.bf16.mxu0 0
        %365 = vmatpush2.bf16.msra.mxu0 0
        %366 = vmatprep.subr.bf16.mxu0 0
        %367 = vmatpush2.bf16.msra.mxu0 0
        %368 = vmatprep.subr.bf16.mxu0 0
        %369 = vmatpush2.bf16.msra.mxu0 0
        %370 = vmatprep.subr.bf16.mxu0 0
        %371 = vmatpush2.bf16.msra.mxu0 0
        %372 = vmatprep.subr.bf16.mxu0 0
        %373 = vmatpush2.bf16.msra.mxu0 0
        %374 = vmatprep.mubr.bf16.mxu0 0
        %375 = vmatmul.mubr.bf16.gmra.mxu0 %v340
        %v376 = vpop.f32.mrf.mxu0
        %v377 = vadd.f32 0.0, %v376
        %v378 = vpop.f32.mrf.mxu0
        %v379 = vadd.f32 0.0, %v378
        %v380 = vpop.f32.mrf.mxu0
        %v381 = vpop.f32.mrf.mxu0
        %382 = vdwg.mxu0
        %383 = vmatprep.subr.bf16.mxu0 0
        %384 = vmatpush1.bf16.msra.mxu0 0
        %385 = vmatprep.subr.bf16.mxu0 0
        %386 = vmatpush1.bf16.msra.mxu0 0
        %387 = vmatprep.subr.bf16.mxu0 0
        %388 = vmatpush1.bf16.msra.mxu0 0
        %389 = vmatprep.subr.bf16.mxu0 0
        %390 = vmatpush1.bf16.msra.mxu0 0
        %391 = vmatprep.subr.bf16.mxu0 0
        %392 = vmatpush1.bf16.msra.mxu0 0
        %393 = vmatprep.subr.bf16.mxu0 %v325
        %394 = vmatpush1.bf16.msra.mxu0 %v324
        %395 = vmatprep.subr.bf16.mxu0 %v321
        %396 = vmatpush1.bf16.msra.mxu0 %v320
        %397 = vmatprep.subr.bf16.mxu0 %v317
        %398 = vmatpush1.bf16.msra.mxu0 %v316
        %399 = vmatprep.subr.bf16.mxu0 0
        %400 = vmatpush2.bf16.msra.mxu0 0
        %401 = vmatprep.subr.bf16.mxu0 0
        %402 = vmatpush2.bf16.msra.mxu0 0
        %403 = vmatprep.subr.bf16.mxu0 0
        %404 = vmatpush2.bf16.msra.mxu0 0
        %405 = vmatprep.subr.bf16.mxu0 0
        %406 = vmatpush2.bf16.msra.mxu0 0
        %407 = vmatprep.subr.bf16.mxu0 0
        %408 = vmatpush2.bf16.msra.mxu0 0
        %409 = vmatprep.subr.bf16.mxu0 0
        %410 = vmatpush2.bf16.msra.mxu0 0
        %411 = vmatprep.subr.bf16.mxu0 0
        %412 = vmatpush2.bf16.msra.mxu0 0
        %413 = vmatprep.subr.bf16.mxu0 0
        %414 = vmatpush2.bf16.msra.mxu0 0
        %415 = vmatprep.mubr.bf16.mxu0 0
        %416 = vmatmul.mubr.bf16.gmra.mxu0 %v340
        %v417 = vpop.f32.mrf.mxu0
        %v418 = vadd.f32 0.0, %v417
        %v419 = vpop.f32.mrf.mxu0
        %v420 = vadd.f32 0.0, %v419
        %v421 = vpop.f32.mrf.mxu0
        %v422 = vpop.f32.mrf.mxu0
        %423 = vdwg.mxu0
        %v424 = vadd.f32 %v261, %v377
        %v425 = vadd.f32 %v262, %v379
        %v426 = vadd.f32 %v263, %v418
        %v427 = vadd.f32 %v264, %v420
        %428 = vst [vmem:[#allocation2] sm:$0xff] %v424
        %429 = vst [vmem:[#allocation2 + $0x8] sm:$0xff] %v425
        %430 = vst [vmem:[#allocation2 + $0x10] sm:$0xff] %v426
        %431 = vst [vmem:[#allocation2 + $0x18] sm:$0xff] %v427
        // Predicated region
        $region56: #{generator_forward.4} parent=46 // pred_check
          %p432 = pneg %p252
        $region57: #{generator_forward.4} parent=46 // pred_check_branch
          %434 = sbr.rel (%p432) target = $region59
        $region58: #{generator_forward.4} parent=46 // pred_region
          %v435 = vld [vmem:[#allocation2] sm:$0xff]
          %v436 = vld [vmem:[#allocation2 + $0x8] sm:$0xff]
          %v437 = vld [vmem:[#allocation2 + $0x10] sm:$0xff]
          %v438 = vld [vmem:[#allocation2 + $0x18] sm:$0xff]
          %439 = vst [vmem:[%s249] sm:$0xff] %v435
          %440 = vst [vmem:[%s249 + $0x8] sm:$0xff] %v436
          %441 = vst [vmem:[%s249 + $0x10] sm:$0xff] %v437
          %442 = vst [vmem:[%s249 + $0x18] sm:$0xff] %v438
        $region59: #{generator_forward.4} parent=46 // pred_fallthru
          _
        %s443 = smul.u32 4, %s19
        %p444 = scmp.lt.s32.totalorder %s18, 0
        %s445 = scalar_select %p444, %s18, 0
        %p446 = scmp.lt.s32.totalorder %s443, 7
        %s447 = scalar_select %p446, %s443, 7
        %s448 = smul.addr %s445, 8
        %s449 = sadd.s32 %s447, %s448
        %s450 = smul.addr %s449, 8
        %s451 = scalar_lea.vmem %s2, %s450
        // Predicated region
        $region60: #{generator_forward.4} parent=46 // pred_check
          %p452 = pneg %p108
        $region61: #{generator_forward.4} parent=46 // pred_check_branch
          %454 = sbr.rel (%p452) target = $region63
        $region62: #{generator_forward.4} parent=46 // pred_region
          %s455 = smul.u32 4, %s19
        $region63: #{generator_forward.4} parent=46 // pred_fallthru
          _
      $region47: #{generator_forward.4} parent=5 // pred_fallthru
        _
      %p456 = scmp.le.s32.totalorder 2, %s8
      // Predicated region
      $region64: #{generator_forward.4} parent=5 // pred_check
        %p457 = pneg %p456
      $region65: #{generator_forward.4} parent=5 // pred_check_branch
        %459 = sbr.rel (%p457) target = $region67
      $region66: #{generator_forward.4} parent=5 // pred_region
        %s460 = ssub.s32 %s8, 2
        // Predicated region
        $region68: #{generator_forward.4} parent=66 // pred_check
          %p461 = pneg %p114
        $region69: #{generator_forward.4} parent=66 // pred_check_branch
          %463 = sbr.rel (%p461) target = $region71
        $region70: #{generator_forward.4} parent=66 // pred_region
          %s464 = smul.u32 4, %s22
          %p465 = scmp.lt.s32.totalorder %s21, 0
          %s466 = scalar_select %p465, %s21, 0
          %p467 = scmp.lt.s32.totalorder %s464, 7
          %s468 = scalar_select %p467, %s464, 7
          %s469 = smul.addr %s466, 8
          %s470 = sadd.s32 %s468, %s469
          %s471 = smul.addr %s470, 8
          %s472 = scalar_lea.vmem %s2, %s471
        $region71: #{generator_forward.4} parent=66 // pred_fallthru
          _
      $region67: #{generator_forward.4} parent=5 // pred_fallthru
        _
    $region6: #{generator_forward.4} parent=1 // loop_footer
      %s12 = sadd.s32 1, %s8
    $region7: #{generator_forward.4} parent=1 // loop_footer_branch
      %7 = sbr.rel target = $region3
    $region8: #{generator_forward.4} parent=1 // loop_exit
      _

// kernel: generator_forward.5
$region0: #{generator_forward.5}
  #allocation0 [shape = 'u32[]', space=smem, size = 0x4, offset = 0x4, fixed_abs, tag = 'smem constant byte address 0x4 - core index']
  #allocation1 [shape = 'u32[144,128]{1,0:T(1,128)}', space=vmem, size = 0x12000, scoped, tag = 'internal scratch']
  #allocation2 [shape = 'f32[32,512]{1,0:T(8,128)}', space=vmem, size = 0x10000, scoped, tag = 'scratch operand']
  %s0 = inlined_call_operand.vmem [shape: f32[32,64], index: 0, kind: input, shape index: {}]
  %s1 = inlined_call_operand.vmem [shape: bf16[64,512], index: 1, kind: input, shape index: {}]
  %s2 = inlined_call_operand.vmem [shape: f32[32,512], index: 2, kind: output, shape index: {}]
  %s3 = sld [smem:[#allocation0]]
  $region26: #{generator_forward.5} parent=0
    _
  %s5 = ssub.s32 1, %s3
  %s6 = scalar_select 0, %s5, %s3
  // Predicated region
  $region2: #{generator_forward.5} parent=0 // pred_check
    _
  $region3: #{generator_forward.5} parent=0 // pred_check_branch
    %8 = sbr.rel (0) target = $region5
  $region4: #{generator_forward.5} parent=0 // pred_region
    _
  $region5: #{generator_forward.5} parent=0 // pred_fallthru
    _
  // Predicated region
  $region6: #{generator_forward.5} parent=0 // pred_check
    _
  $region7: #{generator_forward.5} parent=0 // pred_check_branch
    %10 = sbr.rel (0) target = $region9
  $region8: #{generator_forward.5} parent=0 // pred_region
    _
  $region9: #{generator_forward.5} parent=0 // pred_fallthru
    _
  %p12 = scmp.eq.s32.totalorder 0, 0
  // Predicated region
  $region10: #{generator_forward.5} parent=0 // pred_check
    %p13 = pneg %p12
  $region11: #{generator_forward.5} parent=0 // pred_check_branch
    %15 = sbr.rel (%p13) target = $region13
  $region12: #{generator_forward.5} parent=0 // pred_region
    %16 = vst [vmem:[#allocation2] sm:$0xff] 0.0
    %17 = vst [vmem:[#allocation2 + $0x8] sm:$0xff] 0.0
    %18 = vst [vmem:[#allocation2 + $0x10] sm:$0xff] 0.0
    %19 = vst [vmem:[#allocation2 + $0x18] sm:$0xff] 0.0
    %20 = vst [vmem:[#allocation2 + $0x20] sm:$0xff] 0.0
    %21 = vst [vmem:[#allocation2 + $0x28] sm:$0xff] 0.0
    %22 = vst [vmem:[#allocation2 + $0x30] sm:$0xff] 0.0
    %23 = vst [vmem:[#allocation2 + $0x38] sm:$0xff] 0.0
    %24 = vst [vmem:[#allocation2 + $0x40] sm:$0xff] 0.0
    %25 = vst [vmem:[#allocation2 + $0x48] sm:$0xff] 0.0
    %26 = vst [vmem:[#allocation2 + $0x50] sm:$0xff] 0.0
    %27 = vst [vmem:[#allocation2 + $0x58] sm:$0xff] 0.0
    %28 = vst [vmem:[#allocation2 + $0x60] sm:$0xff] 0.0
    %29 = vst [vmem:[#allocation2 + $0x68] sm:$0xff] 0.0
    %30 = vst [vmem:[#allocation2 + $0x70] sm:$0xff] 0.0
    %31 = vst [vmem:[#allocation2 + $0x78] sm:$0xff] 0.0
  $region13: #{generator_forward.5} parent=0 // pred_fallthru
    _
  %v32 = vld [vmem:[%s0] sm:$0xff]
  %v33 = vld [vmem:[%s0 + $0x8] sm:$0xff]
  %v34 = vld [vmem:[%s0 + $0x10] sm:$0xff]
  %v35 = vld [vmem:[%s0 + $0x18] sm:$0xff]
  %vm36 = vcmp.ge.f32.partialorder %v32, 0.0
  %vm37 = vcmp.ge.f32.partialorder %v33, 0.0
  %vm38 = vcmp.ge.f32.partialorder %v34, 0.0
  %vm39 = vcmp.ge.f32.partialorder %v35, 0.0
  %v40 = vmul.f32 %v32, 0.01
  %v41 = vmul.f32 %v33, 0.01
  %v42 = vmul.f32 %v34, 0.01
  %v43 = vmul.f32 %v35, 0.01
  %v44 = vsel %vm36, %v32, %v40
  %v45 = vsel %vm37, %v33, %v41
  %v46 = vsel %vm38, %v34, %v42
  %v47 = vsel %vm39, %v35, %v43
  %v48 = vld [vmem:[#allocation2] sm:$0xff]
  %v49 = vld [vmem:[#allocation2 + $0x8] sm:$0xff]
  %v50 = vld [vmem:[#allocation2 + $0x10] sm:$0xff]
  %v51 = vld [vmem:[#allocation2 + $0x18] sm:$0xff]
  %v52 = vld [vmem:[#allocation2 + $0x20] sm:$0xff]
  %v53 = vld [vmem:[#allocation2 + $0x28] sm:$0xff]
  %v54 = vld [vmem:[#allocation2 + $0x30] sm:$0xff]
  %v55 = vld [vmem:[#allocation2 + $0x38] sm:$0xff]
  %v56 = vld [vmem:[#allocation2 + $0x40] sm:$0xff]
  %v57 = vld [vmem:[#allocation2 + $0x48] sm:$0xff]
  %v58 = vld [vmem:[#allocation2 + $0x50] sm:$0xff]
  %v59 = vld [vmem:[#allocation2 + $0x58] sm:$0xff]
  %v60 = vld [vmem:[#allocation2 + $0x60] sm:$0xff]
  %v61 = vld [vmem:[#allocation2 + $0x68] sm:$0xff]
  %v62 = vld [vmem:[#allocation2 + $0x70] sm:$0xff]
  %v63 = vld [vmem:[#allocation2 + $0x78] sm:$0xff]
  %v64 = vpack.c.bf16 %v45, %v44
  %v65 = vpack.c.bf16 %v47, %v46
  %v66 = vld [vmem:[%s1] sm:$0xff]
  %v67 = vld [vmem:[%s1 + $0x8] sm:$0xff]
  %v68 = vld [vmem:[%s1 + $0x10] sm:$0xff]
  %v69 = vld [vmem:[%s1 + $0x18] sm:$0xff]
  %v70 = vld [vmem:[%s1 + $0x20] sm:$0xff]
  %v71 = vld [vmem:[%s1 + $0x28] sm:$0xff]
  %v72 = vld [vmem:[%s1 + $0x30] sm:$0xff]
  %v73 = vld [vmem:[%s1 + $0x38] sm:$0xff]
  %v74 = vld [vmem:[%s1 + $0x40] sm:$0xff]
  %v75 = vld [vmem:[%s1 + $0x48] sm:$0xff]
  %v76 = vld [vmem:[%s1 + $0x50] sm:$0xff]
  %v77 = vld [vmem:[%s1 + $0x58] sm:$0xff]
  %v78 = vld [vmem:[%s1 + $0x60] sm:$0xff]
  %v79 = vld [vmem:[%s1 + $0x68] sm:$0xff]
  %v80 = vld [vmem:[%s1 + $0x70] sm:$0xff]
  %v81 = vld [vmem:[%s1 + $0x78] sm:$0xff]
  %v98 = vunpack.c.l.b16 %v66
  %v99 = vunpack.c.h.b16 %v66
  %v100 = vunpack.c.l.b16 %v67
  %v101 = vunpack.c.h.b16 %v67
  %v102 = vunpack.c.l.b16 %v68
  %v103 = vunpack.c.h.b16 %v68
  %v104 = vunpack.c.l.b16 %v69
  %v105 = vunpack.c.h.b16 %v69
  %v106 = vunpack.c.l.b16 %v70
  %v107 = vunpack.c.h.b16 %v70
  %v108 = vunpack.c.l.b16 %v71
  %v109 = vunpack.c.h.b16 %v71
  %v110 = vunpack.c.l.b16 %v72
  %v111 = vunpack.c.h.b16 %v72
  %v112 = vunpack.c.l.b16 %v73
  %v113 = vunpack.c.h.b16 %v73
  %v114 = vunpack.c.l.b16 %v74
  %v115 = vunpack.c.h.b16 %v74
  %v116 = vunpack.c.l.b16 %v75
  %v117 = vunpack.c.h.b16 %v75
  %v118 = vunpack.c.l.b16 %v76
  %v119 = vunpack.c.h.b16 %v76
  %v120 = vunpack.c.l.b16 %v77
  %v121 = vunpack.c.h.b16 %v77
  %v122 = vunpack.c.l.b16 %v78
  %v123 = vunpack.c.h.b16 %v78
  %v124 = vunpack.c.l.b16 %v79
  %v125 = vunpack.c.h.b16 %v79
  %v126 = vunpack.c.l.b16 %v80
  %v127 = vunpack.c.h.b16 %v80
  %v128 = vunpack.c.l.b16 %v81
  %v129 = vunpack.c.h.b16 %v81
  %v130 = vpack.c.b16 %v102, %v98
  %v131 = vpack.c.b16 %v103, %v99
  %v132 = vpack.c.b16 %v104, %v100
  %v133 = vpack.c.b16 %v105, %v101
  %v134 = vpack.c.b16 %v110, %v106
  %v135 = vpack.c.b16 %v111, %v107
  %v136 = vpack.c.b16 %v112, %v108
  %v137 = vpack.c.b16 %v113, %v109
  %v138 = vpack.c.b16 %v118, %v114
  %v139 = vpack.c.b16 %v119, %v115
  %v140 = vpack.c.b16 %v120, %v116
  %v141 = vpack.c.b16 %v121, %v117
  %v142 = vpack.c.b16 %v126, %v122
  %v143 = vpack.c.b16 %v127, %v123
  %v144 = vpack.c.b16 %v128, %v124
  %v145 = vpack.c.b16 %v129, %v125
  %vm162 = vcmask 523264
  %v164 = vsel %vm162, %v64, 0
  %v167 = vsel %vm162, %v65, 0
  %169 = vmatprep.subr.bf16.mxu0 0
  %170 = vmatpush1.bf16.msra.mxu0 0
  %171 = vmatprep.subr.bf16.mxu0 0
  %172 = vmatpush1.bf16.msra.mxu0 0
  %173 = vmatprep.subr.bf16.mxu0 0
  %174 = vmatpush1.bf16.msra.mxu0 0
  %175 = vmatprep.subr.bf16.mxu0 0
  %176 = vmatpush1.bf16.msra.mxu0 0
  %177 = vmatprep.subr.bf16.mxu0 %v143
  %178 = vmatpush1.bf16.msra.mxu0 %v142
  %179 = vmatprep.subr.bf16.mxu0 %v139
  %180 = vmatpush1.bf16.msra.mxu0 %v138
  %181 = vmatprep.subr.bf16.mxu0 %v135
  %182 = vmatpush1.bf16.msra.mxu0 %v134
  %183 = vmatprep.subr.bf16.mxu0 %v131
  %184 = vmatpush1.bf16.msra.mxu0 %v130
  %185 = vmatprep.subr.bf16.mxu0 0
  %186 = vmatpush2.bf16.msra.mxu0 0
  %187 = vmatprep.subr.bf16.mxu0 0
  %188 = vmatpush2.bf16.msra.mxu0 0
  %189 = vmatprep.subr.bf16.mxu0 0
  %190 = vmatpush2.bf16.msra.mxu0 0
  %191 = vmatprep.subr.bf16.mxu0 0
  %192 = vmatpush2.bf16.msra.mxu0 0
  %193 = vmatprep.subr.bf16.mxu0 0
  %194 = vmatpush2.bf16.msra.mxu0 0
  %195 = vmatprep.subr.bf16.mxu0 0
  %196 = vmatpush2.bf16.msra.mxu0 0
  %197 = vmatprep.subr.bf16.mxu0 0
  %198 = vmatpush2.bf16.msra.mxu0 0
  %199 = vmatprep.subr.bf16.mxu0 0
  %200 = vmatpush2.bf16.msra.mxu0 0
  %201 = vmatprep.mubr.bf16.mxu0 0
  %202 = vmatmul.mubr.bf16.gmra.mxu0 %v164
  %v203 = vpop.f32.mrf.mxu0
  %v204 = vadd.f32 0.0, %v203
  %v205 = vpop.f32.mrf.mxu0
  %v206 = vadd.f32 0.0, %v205
  %v207 = vpop.f32.mrf.mxu0
  %v208 = vadd.f32 0.0, %v207
  %v209 = vpop.f32.mrf.mxu0
  %v210 = vadd.f32 0.0, %v209
  %211 = vmatprep.mubr.bf16.mxu0 0
  %212 = vmatmul.mubr.bf16.gmra.mxu0 %v167
  %v213 = vpop.f32.mrf.mxu0
  %v214 = vadd.f32 0.0, %v213
  %v215 = vpop.f32.mrf.mxu0
  %v216 = vadd.f32 0.0, %v215
  %v217 = vpop.f32.mrf.mxu0
  %v218 = vadd.f32 0.0, %v217
  %v219 = vpop.f32.mrf.mxu0
  %v220 = vadd.f32 0.0, %v219
  %221 = vdwg.mxu0
  %222 = vmatprep.subr.bf16.mxu0 0
  %223 = vmatpush1.bf16.msra.mxu0 0
  %224 = vmatprep.subr.bf16.mxu0 0
  %225 = vmatpush1.bf16.msra.mxu0 0
  %226 = vmatprep.subr.bf16.mxu0 0
  %227 = vmatpush1.bf16.msra.mxu0 0
  %228 = vmatprep.subr.bf16.mxu0 0
  %229 = vmatpush1.bf16.msra.mxu0 0
  %230 = vmatprep.subr.bf16.mxu0 %v145
  %231 = vmatpush1.bf16.msra.mxu0 %v144
  %232 = vmatprep.subr.bf16.mxu0 %v141
  %233 = vmatpush1.bf16.msra.mxu0 %v140
  %234 = vmatprep.subr.bf16.mxu0 %v137
  %235 = vmatpush1.bf16.msra.mxu0 %v136
  %236 = vmatprep.subr.bf16.mxu0 %v133
  %237 = vmatpush1.bf16.msra.mxu0 %v132
  %238 = vmatprep.subr.bf16.mxu0 0
  %239 = vmatpush2.bf16.msra.mxu0 0
  %240 = vmatprep.subr.bf16.mxu0 0
  %241 = vmatpush2.bf16.msra.mxu0 0
  %242 = vmatprep.subr.bf16.mxu0 0
  %243 = vmatpush2.bf16.msra.mxu0 0
  %244 = vmatprep.subr.bf16.mxu0 0
  %245 = vmatpush2.bf16.msra.mxu0 0
  %246 = vmatprep.subr.bf16.mxu0 0
  %247 = vmatpush2.bf16.msra.mxu0 0
  %248 = vmatprep.subr.bf16.mxu0 0
  %249 = vmatpush2.bf16.msra.mxu0 0
  %250 = vmatprep.subr.bf16.mxu0 0
  %251 = vmatpush2.bf16.msra.mxu0 0
  %252 = vmatprep.subr.bf16.mxu0 0
  %253 = vmatpush2.bf16.msra.mxu0 0
  %254 = vmatprep.mubr.bf16.mxu0 0
  %255 = vmatmul.mubr.bf16.gmra.mxu0 %v164
  %v256 = vpop.f32.mrf.mxu0
  %v257 = vadd.f32 0.0, %v256
  %v258 = vpop.f32.mrf.mxu0
  %v259 = vadd.f32 0.0, %v258
  %v260 = vpop.f32.mrf.mxu0
  %v261 = vadd.f32 0.0, %v260
  %v262 = vpop.f32.mrf.mxu0
  %v263 = vadd.f32 0.0, %v262
  %264 = vmatprep.mubr.bf16.mxu0 0
  %265 = vmatmul.mubr.bf16.gmra.mxu0 %v167
  %v266 = vpop.f32.mrf.mxu0
  %v267 = vadd.f32 0.0, %v266
  %v268 = vpop.f32.mrf.mxu0
  %v269 = vadd.f32 0.0, %v268
  %v270 = vpop.f32.mrf.mxu0
  %v271 = vadd.f32 0.0, %v270
  %v272 = vpop.f32.mrf.mxu0
  %v273 = vadd.f32 0.0, %v272
  %274 = vdwg.mxu0
  %v275 = vadd.f32 %v48, %v204
  %v276 = vadd.f32 %v49, %v206
  %v277 = vadd.f32 %v50, %v257
  %v278 = vadd.f32 %v51, %v259
  %v279 = vadd.f32 %v52, %v208
  %v280 = vadd.f32 %v53, %v210
  %v281 = vadd.f32 %v54, %v261
  %v282 = vadd.f32 %v55, %v263
  %v283 = vadd.f32 %v56, %v214
  %v284 = vadd.f32 %v57, %v216
  %v285 = vadd.f32 %v58, %v267
  %v286 = vadd.f32 %v59, %v269
  %v287 = vadd.f32 %v60, %v218
  %v288 = vadd.f32 %v61, %v220
  %v289 = vadd.f32 %v62, %v271
  %v290 = vadd.f32 %v63, %v273
  %291 = vst [vmem:[#allocation2] sm:$0xff] %v275
  %292 = vst [vmem:[#allocation2 + $0x8] sm:$0xff] %v276
  %293 = vst [vmem:[#allocation2 + $0x10] sm:$0xff] %v277
  %294 = vst [vmem:[#allocation2 + $0x18] sm:$0xff] %v278
  %295 = vst [vmem:[#allocation2 + $0x20] sm:$0xff] %v279
  %296 = vst [vmem:[#allocation2 + $0x28] sm:$0xff] %v280
  %297 = vst [vmem:[#allocation2 + $0x30] sm:$0xff] %v281
  %298 = vst [vmem:[#allocation2 + $0x38] sm:$0xff] %v282
  %299 = vst [vmem:[#allocation2 + $0x40] sm:$0xff] %v283
  %300 = vst [vmem:[#allocation2 + $0x48] sm:$0xff] %v284
  %301 = vst [vmem:[#allocation2 + $0x50] sm:$0xff] %v285
  %302 = vst [vmem:[#allocation2 + $0x58] sm:$0xff] %v286
  %303 = vst [vmem:[#allocation2 + $0x60] sm:$0xff] %v287
  %304 = vst [vmem:[#allocation2 + $0x68] sm:$0xff] %v288
  %305 = vst [vmem:[#allocation2 + $0x70] sm:$0xff] %v289
  %306 = vst [vmem:[#allocation2 + $0x78] sm:$0xff] %v290
  // Predicated region
  $region14: #{generator_forward.5} parent=0 // pred_check
    %p307 = pneg %p12
  $region15: #{generator_forward.5} parent=0 // pred_check_branch
    %309 = sbr.rel (%p307) target = $region17
  $region16: #{generator_forward.5} parent=0 // pred_region
    %v310 = vld [vmem:[#allocation2] sm:$0xff]
    %v311 = vld [vmem:[#allocation2 + $0x8] sm:$0xff]
    %v312 = vld [vmem:[#allocation2 + $0x10] sm:$0xff]
    %v313 = vld [vmem:[#allocation2 + $0x18] sm:$0xff]
    %v314 = vld [vmem:[#allocation2 + $0x20] sm:$0xff]
    %v315 = vld [vmem:[#allocation2 + $0x28] sm:$0xff]
    %v316 = vld [vmem:[#allocation2 + $0x30] sm:$0xff]
    %v317 = vld [vmem:[#allocation2 + $0x38] sm:$0xff]
    %v318 = vld [vmem:[#allocation2 + $0x40] sm:$0xff]
    %v319 = vld [vmem:[#allocation2 + $0x48] sm:$0xff]
    %v320 = vld [vmem:[#allocation2 + $0x50] sm:$0xff]
    %v321 = vld [vmem:[#allocation2 + $0x58] sm:$0xff]
    %v322 = vld [vmem:[#allocation2 + $0x60] sm:$0xff]
    %v323 = vld [vmem:[#allocation2 + $0x68] sm:$0xff]
    %v324 = vld [vmem:[#allocation2 + $0x70] sm:$0xff]
    %v325 = vld [vmem:[#allocation2 + $0x78] sm:$0xff]
    %326 = vst [vmem:[%s2] sm:$0xff] %v310
    %327 = vst [vmem:[%s2 + $0x8] sm:$0xff] %v311
    %328 = vst [vmem:[%s2 + $0x10] sm:$0xff] %v312
    %329 = vst [vmem:[%s2 + $0x18] sm:$0xff] %v313
    %330 = vst [vmem:[%s2 + $0x20] sm:$0xff] %v314
    %331 = vst [vmem:[%s2 + $0x28] sm:$0xff] %v315
    %332 = vst [vmem:[%s2 + $0x30] sm:$0xff] %v316
    %333 = vst [vmem:[%s2 + $0x38] sm:$0xff] %v317
    %334 = vst [vmem:[%s2 + $0x40] sm:$0xff] %v318
    %335 = vst [vmem:[%s2 + $0x48] sm:$0xff] %v319
    %336 = vst [vmem:[%s2 + $0x50] sm:$0xff] %v320
    %337 = vst [vmem:[%s2 + $0x58] sm:$0xff] %v321
    %338 = vst [vmem:[%s2 + $0x60] sm:$0xff] %v322
    %339 = vst [vmem:[%s2 + $0x68] sm:$0xff] %v323
    %340 = vst [vmem:[%s2 + $0x70] sm:$0xff] %v324
    %341 = vst [vmem:[%s2 + $0x78] sm:$0xff] %v325
  $region17: #{generator_forward.5} parent=0 // pred_fallthru
    _
  // Predicated region
  $region18: #{generator_forward.5} parent=0 // pred_check
    _
  $region19: #{generator_forward.5} parent=0 // pred_check_branch
    %343 = sbr.rel (0) target = $region21
  $region20: #{generator_forward.5} parent=0 // pred_region
    _
  $region21: #{generator_forward.5} parent=0 // pred_fallthru
    _
  // Predicated region
  $region22: #{generator_forward.5} parent=0 // pred_check
    _
  $region23: #{generator_forward.5} parent=0 // pred_check_branch
    %345 = sbr.rel (0) target = $region25
  $region24: #{generator_forward.5} parent=0 // pred_region
    _
  $region25: #{generator_forward.5} parent=0 // pred_fallthru
    _

// kernel: generator_forward.6
$region0: #{generator_forward.6}
  #allocation0 [shape = 'u32[]', space=smem, size = 0x4, offset = 0x4, fixed_abs, tag = 'smem constant byte address 0x4 - core index']
  #allocation1 [shape = 'u32[144,128]{1,0:T(1,128)}', space=vmem, size = 0x12000, scoped, tag = 'internal scratch']
  #allocation2 [shape = 'f32[128,256]{1,0:T(8,128)}', space=vmem, size = 0x20000, scoped, tag = 'scratch operand']
  %s0 = inlined_call_operand.vmem [shape: f32[128,32], index: 0, kind: input, shape index: {}]
  %s1 = inlined_call_operand.vmem [shape: bf16[32,256], index: 1, kind: input, shape index: {}]
  %s2 = inlined_call_operand.vmem [shape: f32[128,256], index: 2, kind: output, shape index: {}]
  %s3 = sld [smem:[#allocation0]]
  $region26: #{generator_forward.6} parent=0
    _
  %s5 = ssub.s32 1, %s3
  %s6 = scalar_select 0, %s5, %s3
  // Predicated region
  $region2: #{generator_forward.6} parent=0 // pred_check
    _
  $region3: #{generator_forward.6} parent=0 // pred_check_branch
    %8 = sbr.rel (0) target = $region5
  $region4: #{generator_forward.6} parent=0 // pred_region
    _
  $region5: #{generator_forward.6} parent=0 // pred_fallthru
    _
  // Predicated region
  $region6: #{generator_forward.6} parent=0 // pred_check
    _
  $region7: #{generator_forward.6} parent=0 // pred_check_branch
    %10 = sbr.rel (0) target = $region9
  $region8: #{generator_forward.6} parent=0 // pred_region
    _
  $region9: #{generator_forward.6} parent=0 // pred_fallthru
    _
  %p12 = scmp.eq.s32.totalorder 0, 0
  // Predicated region
  $region10: #{generator_forward.6} parent=0 // pred_check
    %p13 = pneg %p12
  $region11: #{generator_forward.6} parent=0 // pred_check_branch
    %15 = sbr.rel (%p13) target = $region13
  $region12: #{generator_forward.6} parent=0 // pred_region
    %16 = vst [vmem:[#allocation2] sm:$0xff] 0.0
    %17 = vst [vmem:[#allocation2 + $0x8] sm:$0xff] 0.0
    %18 = vst [vmem:[#allocation2 + $0x10] sm:$0xff] 0.0
    %19 = vst [vmem:[#allocation2 + $0x18] sm:$0xff] 0.0
    %20 = vst [vmem:[#allocation2 + $0x20] sm:$0xff] 0.0
    %21 = vst [vmem:[#allocation2 + $0x28] sm:$0xff] 0.0
    %22 = vst [vmem:[#allocation2 + $0x30] sm:$0xff] 0.0
    %23 = vst [vmem:[#allocation2 + $0x38] sm:$0xff] 0.0
    %24 = vst [vmem:[#allocation2 + $0x40] sm:$0xff] 0.0
    %25 = vst [vmem:[#allocation2 + $0x48] sm:$0xff] 0.0
    %26 = vst [vmem:[#allocation2 + $0x50] sm:$0xff] 0.0
    %27 = vst [vmem:[#allocation2 + $0x58] sm:$0xff] 0.0
    %28 = vst [vmem:[#allocation2 + $0x60] sm:$0xff] 0.0
    %29 = vst [vmem:[#allocation2 + $0x68] sm:$0xff] 0.0
    %30 = vst [vmem:[#allocation2 + $0x70] sm:$0xff] 0.0
    %31 = vst [vmem:[#allocation2 + $0x78] sm:$0xff] 0.0
    %32 = vst [vmem:[#allocation2 + $0x80] sm:$0xff] 0.0
    %33 = vst [vmem:[#allocation2 + $0x88] sm:$0xff] 0.0
    %34 = vst [vmem:[#allocation2 + $0x90] sm:$0xff] 0.0
    %35 = vst [vmem:[#allocation2 + $0x98] sm:$0xff] 0.0
    %36 = vst [vmem:[#allocation2 + $0xa0] sm:$0xff] 0.0
    %37 = vst [vmem:[#allocation2 + $0xa8] sm:$0xff] 0.0
    %38 = vst [vmem:[#allocation2 + $0xb0] sm:$0xff] 0.0
    %39 = vst [vmem:[#allocation2 + $0xb8] sm:$0xff] 0.0
    %40 = vst [vmem:[#allocation2 + $0xc0] sm:$0xff] 0.0
    %41 = vst [vmem:[#allocation2 + $0xc8] sm:$0xff] 0.0
    %42 = vst [vmem:[#allocation2 + $0xd0] sm:$0xff] 0.0
    %43 = vst [vmem:[#allocation2 + $0xd8] sm:$0xff] 0.0
    %44 = vst [vmem:[#allocation2 + $0xe0] sm:$0xff] 0.0
    %45 = vst [vmem:[#allocation2 + $0xe8] sm:$0xff] 0.0
    %46 = vst [vmem:[#allocation2 + $0xf0] sm:$0xff] 0.0
    %47 = vst [vmem:[#allocation2 + $0xf8] sm:$0xff] 0.0
  $region13: #{generator_forward.6} parent=0 // pred_fallthru
    _
  %v48 = vld [vmem:[%s0] sm:$0xff]
  %v49 = vld [vmem:[%s0 + $0x8] sm:$0xff]
  %v50 = vld [vmem:[%s0 + $0x10] sm:$0xff]
  %v51 = vld [vmem:[%s0 + $0x18] sm:$0xff]
  %v52 = vld [vmem:[%s0 + $0x20] sm:$0xff]
  %v53 = vld [vmem:[%s0 + $0x28] sm:$0xff]
  %v54 = vld [vmem:[%s0 + $0x30] sm:$0xff]
  %v55 = vld [vmem:[%s0 + $0x38] sm:$0xff]
  %v56 = vld [vmem:[%s0 + $0x40] sm:$0xff]
  %v57 = vld [vmem:[%s0 + $0x48] sm:$0xff]
  %v58 = vld [vmem:[%s0 + $0x50] sm:$0xff]
  %v59 = vld [vmem:[%s0 + $0x58] sm:$0xff]
  %v60 = vld [vmem:[%s0 + $0x60] sm:$0xff]
  %v61 = vld [vmem:[%s0 + $0x68] sm:$0xff]
  %v62 = vld [vmem:[%s0 + $0x70] sm:$0xff]
  %v63 = vld [vmem:[%s0 + $0x78] sm:$0xff]
  %vm64 = vcmp.ge.f32.partialorder %v48, 0.0
  %vm65 = vcmp.ge.f32.partialorder %v49, 0.0
  %vm66 = vcmp.ge.f32.partialorder %v50, 0.0
  %vm67 = vcmp.ge.f32.partialorder %v51, 0.0
  %vm68 = vcmp.ge.f32.partialorder %v52, 0.0
  %vm69 = vcmp.ge.f32.partialorder %v53, 0.0
  %vm70 = vcmp.ge.f32.partialorder %v54, 0.0
  %vm71 = vcmp.ge.f32.partialorder %v55, 0.0
  %vm72 = vcmp.ge.f32.partialorder %v56, 0.0
  %vm73 = vcmp.ge.f32.partialorder %v57, 0.0
  %vm74 = vcmp.ge.f32.partialorder %v58, 0.0
  %vm75 = vcmp.ge.f32.partialorder %v59, 0.0
  %vm76 = vcmp.ge.f32.partialorder %v60, 0.0
  %vm77 = vcmp.ge.f32.partialorder %v61, 0.0
  %vm78 = vcmp.ge.f32.partialorder %v62, 0.0
  %vm79 = vcmp.ge.f32.partialorder %v63, 0.0
  %v80 = vmul.f32 %v48, 0.01
  %v81 = vmul.f32 %v49, 0.01
  %v82 = vmul.f32 %v50, 0.01
  %v83 = vmul.f32 %v51, 0.01
  %v84 = vmul.f32 %v52, 0.01
  %v85 = vmul.f32 %v53, 0.01
  %v86 = vmul.f32 %v54, 0.01
  %v87 = vmul.f32 %v55, 0.01
  %v88 = vmul.f32 %v56, 0.01
  %v89 = vmul.f32 %v57, 0.01
  %v90 = vmul.f32 %v58, 0.01
  %v91 = vmul.f32 %v59, 0.01
  %v92 = vmul.f32 %v60, 0.01
  %v93 = vmul.f32 %v61, 0.01
  %v94 = vmul.f32 %v62, 0.01
  %v95 = vmul.f32 %v63, 0.01
  %v96 = vsel %vm64, %v48, %v80
  %v97 = vsel %vm65, %v49, %v81
  %v98 = vsel %vm66, %v50, %v82
  %v99 = vsel %vm67, %v51, %v83
  %v100 = vsel %vm68, %v52, %v84
  %v101 = vsel %vm69, %v53, %v85
  %v102 = vsel %vm70, %v54, %v86
  %v103 = vsel %vm71, %v55, %v87
  %v104 = vsel %vm72, %v56, %v88
  %v105 = vsel %vm73, %v57, %v89
  %v106 = vsel %vm74, %v58, %v90
  %v107 = vsel %vm75, %v59, %v91
  %v108 = vsel %vm76, %v60, %v92
  %v109 = vsel %vm77, %v61, %v93
  %v110 = vsel %vm78, %v62, %v94
  %v111 = vsel %vm79, %v63, %v95
  %v112 = vld [vmem:[#allocation2] sm:$0xff]
  %v113 = vld [vmem:[#allocation2 + $0x8] sm:$0xff]
  %v114 = vld [vmem:[#allocation2 + $0x10] sm:$0xff]
  %v115 = vld [vmem:[#allocation2 + $0x18] sm:$0xff]
  %v116 = vld [vmem:[#allocation2 + $0x20] sm:$0xff]
  %v117 = vld [vmem:[#allocation2 + $0x28] sm:$0xff]
  %v118 = vld [vmem:[#allocation2 + $0x30] sm:$0xff]
  %v119 = vld [vmem:[#allocation2 + $0x38] sm:$0xff]
  %v120 = vld [vmem:[#allocation2 + $0x40] sm:$0xff]
  %v121 = vld [vmem:[#allocation2 + $0x48] sm:$0xff]
  %v122 = vld [vmem:[#allocation2 + $0x50] sm:$0xff]
  %v123 = vld [vmem:[#allocation2 + $0x58] sm:$0xff]
  %v124 = vld [vmem:[#allocation2 + $0x60] sm:$0xff]
  %v125 = vld [vmem:[#allocation2 + $0x68] sm:$0xff]
  %v126 = vld [vmem:[#allocation2 + $0x70] sm:$0xff]
  %v127 = vld [vmem:[#allocation2 + $0x78] sm:$0xff]
  %v128 = vld [vmem:[#allocation2 + $0x80] sm:$0xff]
  %v129 = vld [vmem:[#allocation2 + $0x88] sm:$0xff]
  %v130 = vld [vmem:[#allocation2 + $0x90] sm:$0xff]
  %v131 = vld [vmem:[#allocation2 + $0x98] sm:$0xff]
  %v132 = vld [vmem:[#allocation2 + $0xa0] sm:$0xff]
  %v133 = vld [vmem:[#allocation2 + $0xa8] sm:$0xff]
  %v134 = vld [vmem:[#allocation2 + $0xb0] sm:$0xff]
  %v135 = vld [vmem:[#allocation2 + $0xb8] sm:$0xff]
  %v136 = vld [vmem:[#allocation2 + $0xc0] sm:$0xff]
  %v137 = vld [vmem:[#allocation2 + $0xc8] sm:$0xff]
  %v138 = vld [vmem:[#allocation2 + $0xd0] sm:$0xff]
  %v139 = vld [vmem:[#allocation2 + $0xd8] sm:$0xff]
  %v140 = vld [vmem:[#allocation2 + $0xe0] sm:$0xff]
  %v141 = vld [vmem:[#allocation2 + $0xe8] sm:$0xff]
  %v142 = vld [vmem:[#allocation2 + $0xf0] sm:$0xff]
  %v143 = vld [vmem:[#allocation2 + $0xf8] sm:$0xff]
  %v144 = vpack.c.bf16 %v97, %v96
  %v145 = vpack.c.bf16 %v99, %v98
  %v146 = vpack.c.bf16 %v101, %v100
  %v147 = vpack.c.bf16 %v103, %v102
  %v148 = vpack.c.bf16 %v105, %v104
  %v149 = vpack.c.bf16 %v107, %v106
  %v150 = vpack.c.bf16 %v109, %v108
  %v151 = vpack.c.bf16 %v111, %v110
  %v152 = vld [vmem:[%s1] sm:$0xff]
  %v153 = vld [vmem:[%s1 + $0x8] sm:$0xff]
  %v154 = vld [vmem:[%s1 + $0x10] sm:$0xff]
  %v155 = vld [vmem:[%s1 + $0x18] sm:$0xff]
  %v160 = vunpack.c.l.b16 %v152
  %v161 = vunpack.c.h.b16 %v152
  %v162 = vunpack.c.l.b16 %v153
  %v163 = vunpack.c.h.b16 %v153
  %v164 = vunpack.c.l.b16 %v154
  %v165 = vunpack.c.h.b16 %v154
  %v166 = vunpack.c.l.b16 %v155
  %v167 = vunpack.c.h.b16 %v155
  %v168 = vpack.c.b16 %v162, %v160
  %v169 = vpack.c.b16 %v163, %v161
  %v170 = vpack.c.b16 %v166, %v164
  %v171 = vpack.c.b16 %v167, %v165
  %vm176 = vcmask 261120
  %v178 = vsel %vm176, %v144, 0
  %v181 = vsel %vm176, %v145, 0
  %v184 = vsel %vm176, %v146, 0
  %v187 = vsel %vm176, %v147, 0
  %v190 = vsel %vm176, %v148, 0
  %v193 = vsel %vm176, %v149, 0
  %v196 = vsel %vm176, %v150, 0
  %v199 = vsel %vm176, %v151, 0
  %201 = vmatprep.subr.bf16.mxu0 0
  %202 = vmatpush1.bf16.msra.mxu0 0
  %203 = vmatprep.subr.bf16.mxu0 0
  %204 = vmatpush1.bf16.msra.mxu0 0
  %205 = vmatprep.subr.bf16.mxu0 0
  %206 = vmatpush1.bf16.msra.mxu0 0
  %207 = vmatprep.subr.bf16.mxu0 0
  %208 = vmatpush1.bf16.msra.mxu0 0
  %209 = vmatprep.subr.bf16.mxu0 0
  %210 = vmatpush1.bf16.msra.mxu0 0
  %211 = vmatprep.subr.bf16.mxu0 0
  %212 = vmatpush1.bf16.msra.mxu0 0
  %213 = vmatprep.subr.bf16.mxu0 %v171
  %214 = vmatpush1.bf16.msra.mxu0 %v170
  %215 = vmatprep.subr.bf16.mxu0 %v169
  %216 = vmatpush1.bf16.msra.mxu0 %v168
  %217 = vmatprep.subr.bf16.mxu0 0
  %218 = vmatpush2.bf16.msra.mxu0 0
  %219 = vmatprep.subr.bf16.mxu0 0
  %220 = vmatpush2.bf16.msra.mxu0 0
  %221 = vmatprep.subr.bf16.mxu0 0
  %222 = vmatpush2.bf16.msra.mxu0 0
  %223 = vmatprep.subr.bf16.mxu0 0
  %224 = vmatpush2.bf16.msra.mxu0 0
  %225 = vmatprep.subr.bf16.mxu0 0
  %226 = vmatpush2.bf16.msra.mxu0 0
  %227 = vmatprep.subr.bf16.mxu0 0
  %228 = vmatpush2.bf16.msra.mxu0 0
  %229 = vmatprep.subr.bf16.mxu0 0
  %230 = vmatpush2.bf16.msra.mxu0 0
  %231 = vmatprep.subr.bf16.mxu0 0
  %232 = vmatpush2.bf16.msra.mxu0 0
  %233 = vmatprep.mubr.bf16.mxu0 0
  %234 = vmatmul.mubr.bf16.gmra.mxu0 %v178
  %v235 = vpop.f32.mrf.mxu0
  %v236 = vadd.f32 0.0, %v235
  %v237 = vpop.f32.mrf.mxu0
  %v238 = vadd.f32 0.0, %v237
  %v239 = vpop.f32.mrf.mxu0
  %v240 = vadd.f32 0.0, %v239
  %v241 = vpop.f32.mrf.mxu0
  %v242 = vadd.f32 0.0, %v241
  %243 = vmatprep.mubr.bf16.mxu0 0
  %244 = vmatmul.mubr.bf16.gmra.mxu0 %v181
  %v245 = vpop.f32.mrf.mxu0
  %v246 = vadd.f32 0.0, %v245
  %v247 = vpop.f32.mrf.mxu0
  %v248 = vadd.f32 0.0, %v247
  %v249 = vpop.f32.mrf.mxu0
  %v250 = vadd.f32 0.0, %v249
  %v251 = vpop.f32.mrf.mxu0
  %v252 = vadd.f32 0.0, %v251
  %253 = vmatprep.mubr.bf16.mxu0 0
  %254 = vmatmul.mubr.bf16.gmra.mxu0 %v184
  %v255 = vpop.f32.mrf.mxu0
  %v256 = vadd.f32 0.0, %v255
  %v257 = vpop.f32.mrf.mxu0
  %v258 = vadd.f32 0.0, %v257
  %v259 = vpop.f32.mrf.mxu0
  %v260 = vadd.f32 0.0, %v259
  %v261 = vpop.f32.mrf.mxu0
  %v262 = vadd.f32 0.0, %v261
  %263 = vmatprep.mubr.bf16.mxu0 0
  %264 = vmatmul.mubr.bf16.gmra.mxu0 %v187
  %v265 = vpop.f32.mrf.mxu0
  %v266 = vadd.f32 0.0, %v265
  %v267 = vpop.f32.mrf.mxu0
  %v268 = vadd.f32 0.0, %v267
  %v269 = vpop.f32.mrf.mxu0
  %v270 = vadd.f32 0.0, %v269
  %v271 = vpop.f32.mrf.mxu0
  %v272 = vadd.f32 0.0, %v271
  %273 = vmatprep.mubr.bf16.mxu0 0
  %274 = vmatmul.mubr.bf16.gmra.mxu0 %v190
  %v275 = vpop.f32.mrf.mxu0
  %v276 = vadd.f32 0.0, %v275
  %v277 = vpop.f32.mrf.mxu0
  %v278 = vadd.f32 0.0, %v277
  %v279 = vpop.f32.mrf.mxu0
  %v280 = vadd.f32 0.0, %v279
  %v281 = vpop.f32.mrf.mxu0
  %v282 = vadd.f32 0.0, %v281
  %283 = vmatprep.mubr.bf16.mxu0 0
  %284 = vmatmul.mubr.bf16.gmra.mxu0 %v193
  %v285 = vpop.f32.mrf.mxu0
  %v286 = vadd.f32 0.0, %v285
  %v287 = vpop.f32.mrf.mxu0
  %v288 = vadd.f32 0.0, %v287
  %v289 = vpop.f32.mrf.mxu0
  %v290 = vadd.f32 0.0, %v289
  %v291 = vpop.f32.mrf.mxu0
  %v292 = vadd.f32 0.0, %v291
  %293 = vmatprep.mubr.bf16.mxu0 0
  %294 = vmatmul.mubr.bf16.gmra.mxu0 %v196
  %v295 = vpop.f32.mrf.mxu0
  %v296 = vadd.f32 0.0, %v295
  %v297 = vpop.f32.mrf.mxu0
  %v298 = vadd.f32 0.0, %v297
  %v299 = vpop.f32.mrf.mxu0
  %v300 = vadd.f32 0.0, %v299
  %v301 = vpop.f32.mrf.mxu0
  %v302 = vadd.f32 0.0, %v301
  %303 = vmatprep.mubr.bf16.mxu0 0
  %304 = vmatmul.mubr.bf16.gmra.mxu0 %v199
  %v305 = vpop.f32.mrf.mxu0
  %v306 = vadd.f32 0.0, %v305
  %v307 = vpop.f32.mrf.mxu0
  %v308 = vadd.f32 0.0, %v307
  %v309 = vpop.f32.mrf.mxu0
  %v310 = vadd.f32 0.0, %v309
  %v311 = vpop.f32.mrf.mxu0
  %v312 = vadd.f32 0.0, %v311
  %313 = vdwg.mxu0
  %v314 = vadd.f32 %v112, %v236
  %v315 = vadd.f32 %v113, %v238
  %v316 = vadd.f32 %v114, %v240
  %v317 = vadd.f32 %v115, %v242
  %v318 = vadd.f32 %v116, %v246
  %v319 = vadd.f32 %v117, %v248
  %v320 = vadd.f32 %v118, %v250
  %v321 = vadd.f32 %v119, %v252
  %v322 = vadd.f32 %v120, %v256
  %v323 = vadd.f32 %v121, %v258
  %v324 = vadd.f32 %v122, %v260
  %v325 = vadd.f32 %v123, %v262
  %v326 = vadd.f32 %v124, %v266
  %v327 = vadd.f32 %v125, %v268
  %v328 = vadd.f32 %v126, %v270
  %v329 = vadd.f32 %v127, %v272
  %v330 = vadd.f32 %v128, %v276
  %v331 = vadd.f32 %v129, %v278
  %v332 = vadd.f32 %v130, %v280
  %v333 = vadd.f32 %v131, %v282
  %v334 = vadd.f32 %v132, %v286
  %v335 = vadd.f32 %v133, %v288
  %v336 = vadd.f32 %v134, %v290
  %v337 = vadd.f32 %v135, %v292
  %v338 = vadd.f32 %v136, %v296
  %v339 = vadd.f32 %v137, %v298
  %v340 = vadd.f32 %v138, %v300
  %v341 = vadd.f32 %v139, %v302
  %v342 = vadd.f32 %v140, %v306
  %v343 = vadd.f32 %v141, %v308
  %v344 = vadd.f32 %v142, %v310
  %v345 = vadd.f32 %v143, %v312
  %346 = vst [vmem:[#allocation2] sm:$0xff] %v314
  %347 = vst [vmem:[#allocation2 + $0x8] sm:$0xff] %v315
  %348 = vst [vmem:[#allocation2 + $0x10] sm:$0xff] %v316
  %349 = vst [vmem:[#allocation2 + $0x18] sm:$0xff] %v317
  %350 = vst [vmem:[#allocation2 + $0x20] sm:$0xff] %v318
  %351 = vst [vmem:[#allocation2 + $0x28] sm:$0xff] %v319
  %352 = vst [vmem:[#allocation2 + $0x30] sm:$0xff] %v320
  %353 = vst [vmem:[#allocation2 + $0x38] sm:$0xff] %v321
  %354 = vst [vmem:[#allocation2 + $0x40] sm:$0xff] %v322
  %355 = vst [vmem:[#allocation2 + $0x48] sm:$0xff] %v323
  %356 = vst [vmem:[#allocation2 + $0x50] sm:$0xff] %v324
  %357 = vst [vmem:[#allocation2 + $0x58] sm:$0xff] %v325
  %358 = vst [vmem:[#allocation2 + $0x60] sm:$0xff] %v326
  %359 = vst [vmem:[#allocation2 + $0x68] sm:$0xff] %v327
  %360 = vst [vmem:[#allocation2 + $0x70] sm:$0xff] %v328
  %361 = vst [vmem:[#allocation2 + $0x78] sm:$0xff] %v329
  %362 = vst [vmem:[#allocation2 + $0x80] sm:$0xff] %v330
  %363 = vst [vmem:[#allocation2 + $0x88] sm:$0xff] %v331
  %364 = vst [vmem:[#allocation2 + $0x90] sm:$0xff] %v332
  %365 = vst [vmem:[#allocation2 + $0x98] sm:$0xff] %v333
  %366 = vst [vmem:[#allocation2 + $0xa0] sm:$0xff] %v334
  %367 = vst [vmem:[#allocation2 + $0xa8] sm:$0xff] %v335
  %368 = vst [vmem:[#allocation2 + $0xb0] sm:$0xff] %v336
  %369 = vst [vmem:[#allocation2 + $0xb8] sm:$0xff] %v337
  %370 = vst [vmem:[#allocation2 + $0xc0] sm:$0xff] %v338
  %371 = vst [vmem:[#allocation2 + $0xc8] sm:$0xff] %v339
  %372 = vst [vmem:[#allocation2 + $0xd0] sm:$0xff] %v340
  %373 = vst [vmem:[#allocation2 + $0xd8] sm:$0xff] %v341
  %374 = vst [vmem:[#allocation2 + $0xe0] sm:$0xff] %v342
  %375 = vst [vmem:[#allocation2 + $0xe8] sm:$0xff] %v343
  %376 = vst [vmem:[#allocation2 + $0xf0] sm:$0xff] %v344
  %377 = vst [vmem:[#allocation2 + $0xf8] sm:$0xff] %v345
  // Predicated region
  $region14: #{generator_forward.6} parent=0 // pred_check
    %p378 = pneg %p12
  $region15: #{generator_forward.6} parent=0 // pred_check_branch
    %380 = sbr.rel (%p378) target = $region17
  $region16: #{generator_forward.6} parent=0 // pred_region
    %v381 = vld [vmem:[#allocation2] sm:$0xff]
    %v382 = vld [vmem:[#allocation2 + $0x8] sm:$0xff]
    %v383 = vld [vmem:[#allocation2 + $0x10] sm:$0xff]
    %v384 = vld [vmem:[#allocation2 + $0x18] sm:$0xff]
    %v385 = vld [vmem:[#allocation2 + $0x20] sm:$0xff]
    %v386 = vld [vmem:[#allocation2 + $0x28] sm:$0xff]
    %v387 = vld [vmem:[#allocation2 + $0x30] sm:$0xff]
    %v388 = vld [vmem:[#allocation2 + $0x38] sm:$0xff]
    %v389 = vld [vmem:[#allocation2 + $0x40] sm:$0xff]
    %v390 = vld [vmem:[#allocation2 + $0x48] sm:$0xff]
    %v391 = vld [vmem:[#allocation2 + $0x50] sm:$0xff]
    %v392 = vld [vmem:[#allocation2 + $0x58] sm:$0xff]
    %v393 = vld [vmem:[#allocation2 + $0x60] sm:$0xff]
    %v394 = vld [vmem:[#allocation2 + $0x68] sm:$0xff]
    %v395 = vld [vmem:[#allocation2 + $0x70] sm:$0xff]
    %v396 = vld [vmem:[#allocation2 + $0x78] sm:$0xff]
    %v397 = vld [vmem:[#allocation2 + $0x80] sm:$0xff]
    %v398 = vld [vmem:[#allocation2 + $0x88] sm:$0xff]
    %v399 = vld [vmem:[#allocation2 + $0x90] sm:$0xff]
    %v400 = vld [vmem:[#allocation2 + $0x98] sm:$0xff]
    %v401 = vld [vmem:[#allocation2 + $0xa0] sm:$0xff]
    %v402 = vld [vmem:[#allocation2 + $0xa8] sm:$0xff]
    %v403 = vld [vmem:[#allocation2 + $0xb0] sm:$0xff]
    %v404 = vld [vmem:[#allocation2 + $0xb8] sm:$0xff]
    %v405 = vld [vmem:[#allocation2 + $0xc0] sm:$0xff]
    %v406 = vld [vmem:[#allocation2 + $0xc8] sm:$0xff]
    %v407 = vld [vmem:[#allocation2 + $0xd0] sm:$0xff]
    %v408 = vld [vmem:[#allocation2 + $0xd8] sm:$0xff]
    %v409 = vld [vmem:[#allocation2 + $0xe0] sm:$0xff]
    %v410 = vld [vmem:[#allocation2 + $0xe8] sm:$0xff]
    %v411 = vld [vmem:[#allocation2 + $0xf0] sm:$0xff]
    %v412 = vld [vmem:[#allocation2 + $0xf8] sm:$0xff]
    %413 = vst [vmem:[%s2] sm:$0xff] %v381
    %414 = vst [vmem:[%s2 + $0x8] sm:$0xff] %v382
    %415 = vst [vmem:[%s2 + $0x10] sm:$0xff] %v383
    %416 = vst [vmem:[%s2 + $0x18] sm:$0xff] %v384
    %417 = vst [vmem:[%s2 + $0x20] sm:$0xff] %v385
    %418 = vst [vmem:[%s2 + $0x28] sm:$0xff] %v386
    %419 = vst [vmem:[%s2 + $0x30] sm:$0xff] %v387
    %420 = vst [vmem:[%s2 + $0x38] sm:$0xff] %v388
    %421 = vst [vmem:[%s2 + $0x40] sm:$0xff] %v389
    %422 = vst [vmem:[%s2 + $0x48] sm:$0xff] %v390
    %423 = vst [vmem:[%s2 + $0x50] sm:$0xff] %v391
    %424 = vst [vmem:[%s2 + $0x58] sm:$0xff] %v392
    %425 = vst [vmem:[%s2 + $0x60] sm:$0xff] %v393
    %426 = vst [vmem:[%s2 + $0x68] sm:$0xff] %v394
    %427 = vst [vmem:[%s2 + $0x70] sm:$0xff] %v395
    %428 = vst [vmem:[%s2 + $0x78] sm:$0xff] %v396
    %429 = vst [vmem:[%s2 + $0x80] sm:$0xff] %v397
    %430 = vst [vmem:[%s2 + $0x88] sm:$0xff] %v398
    %431 = vst [vmem:[%s2 + $0x90] sm:$0xff] %v399
    %432 = vst [vmem:[%s2 + $0x98] sm:$0xff] %v400
    %433 = vst [vmem:[%s2 + $0xa0] sm:$0xff] %v401
    %434 = vst [vmem:[%s2 + $0xa8] sm:$0xff] %v402
    %435 = vst [vmem:[%s2 + $0xb0] sm:$0xff] %v403
    %436 = vst [vmem:[%s2 + $0xb8] sm:$0xff] %v404
    %437 = vst [vmem:[%s2 + $0xc0] sm:$0xff] %v405
    %438 = vst [vmem:[%s2 + $0xc8] sm:$0xff] %v406
    %439 = vst [vmem:[%s2 + $0xd0] sm:$0xff] %v407
    %440 = vst [vmem:[%s2 + $0xd8] sm:$0xff] %v408
    %441 = vst [vmem:[%s2 + $0xe0] sm:$0xff] %v409
    %442 = vst [vmem:[%s2 + $0xe8] sm:$0xff] %v410
    %443 = vst [vmem:[%s2 + $0xf0] sm:$0xff] %v411
    %444 = vst [vmem:[%s2 + $0xf8] sm:$0xff] %v412
  $region17: #{generator_forward.6} parent=0 // pred_fallthru
    _
  // Predicated region
  $region18: #{generator_forward.6} parent=0 // pred_check
    _
  $region19: #{generator_forward.6} parent=0 // pred_check_branch
    %446 = sbr.rel (0) target = $region21
  $region20: #{generator_forward.6} parent=0 // pred_region
    _
  $region21: #{generator_forward.6} parent=0 // pred_fallthru
    _
  // Predicated region
  $region22: #{generator_forward.6} parent=0 // pred_check
    _
  $region23: #{generator_forward.6} parent=0 // pred_check_branch
    %448 = sbr.rel (0) target = $region25
  $region24: #{generator_forward.6} parent=0 // pred_region
    _
  $region25: #{generator_forward.6} parent=0 // pred_fallthru
    _

// kernel: generator_forward.7
$region0: #{generator_forward.7}
  #allocation0 [shape = 'u32[]', space=smem, size = 0x4, offset = 0x4, fixed_abs, tag = 'smem constant byte address 0x4 - core index']
  #allocation1 [shape = 'u32[144,128]{1,0:T(1,128)}', space=vmem, size = 0x12000, scoped, tag = 'internal scratch']
  #allocation2 [shape = 'f32[256,128]{1,0:T(8,128)}', space=vmem, size = 0x20000, scoped, tag = 'scratch operand']
  %s0 = inlined_call_operand.vmem [shape: f32[512,16], index: 0, kind: input, shape index: {}]
  %s1 = inlined_call_operand.vmem [shape: bf16[16,128], index: 1, kind: input, shape index: {}]
  %s2 = inlined_call_operand.vmem [shape: f32[512,128], index: 2, kind: output, shape index: {}]
  %s3 = sld [smem:[#allocation0]]
  $region49: #{generator_forward.7} parent=0
    _
  %s5 = ssub.s32 1, %s3
  %s6 = scalar_select 0, %s5, %s3
  loop: start=0, step=1, limit=4
  $region2: #{generator_forward.7} parent=0 // loop_pre_header
    _
  $region3: #{generator_forward.7} parent=0 // loop_header
    %s8 = sphi 0, %s12
    %p9 = scmp.ge.s32.totalorder %s8, 4
    %s15 = sphi 0, %s34
    %s16 = sphi 0, %s30
    %s17 = sphi 0, %s26
    %s18 = sphi 0, %s15
    %s19 = sphi 0, %s16
    %s20 = sphi 0, %s17
    %s21 = sphi 0, %s18
    %s22 = sphi 0, %s19
    %s23 = sphi 0, %s20
    %s39 = sphi 0, %s41
    %s42 = sphi 0, %s39
    %s43 = sphi 0, %s42
    %s59 = sphi 0, %s43
    %s67 = sphi 0, %s69
    %s70 = sphi 0, %s67
    %s71 = sphi 0, %s70
    %s87 = sphi 0, %s71
    %s95 = sphi 0, %s97
    %s98 = sphi 0, %s95
    %s99 = sphi 0, %s98
    %s115 = sphi 0, %s99
  $region4: #{generator_forward.7} parent=0 // loop_header_branch
    %11 = sbr.rel (%p9) target = $region8
  $region5: #{generator_forward.7} parent=0 // loop_body
    %s13 = ssub.s32 %s8, 1
    %s14 = ssub.s32 %s8, 2
    %s24 = sadd.s32 1, %s17
    %p25 = scmp.ge.s32.totalorder %s24, 1
    %s26 = scalar_select %p25, 0, %s24
    %s27 = sadd.s32 1, %s16
    %s28 = scalar_select %p25, %s27, %s16
    %p29 = scmp.ge.s32.totalorder %s28, 1
    %s30 = scalar_select %p29, 0, %s28
    %s31 = sadd.s32 1, %s15
    %s32 = scalar_select %p29, %s31, %s15
    %p33 = scmp.ge.s32.totalorder %s32, 2
    %s34 = scalar_select %p33, 0, %s32
    %s35 = ssub.s32 %s15, %s34
    %s36 = ssub.s32 %s17, %s26
    %s37 = sor.u32 %s35, %s36
    %p38 = scmp.eq.s32.totalorder %s37, 0
    %s40 = sadd.s32 %s39, 1
    %s41 = scalar_select %p38, %s39, %s40
    %p44 = pneg %p38
    %p45 = scmp.eq.s32.totalorder %s8, 1
    %p46 = por %p44, %p45
    %p47 = scmp.ne.s32.totalorder %s39, %s42
    %p48 = scmp.eq.s32.totalorder %s8, 0
    %p49 = por %p47, %p48
    %p50 = scmp.ne.s32.totalorder %s39, %s42
    %p51 = scmp.eq.s32.totalorder %s13, 1
    %p52 = por %p50, %p51
    %p53 = scmp.ne.s32.totalorder %s42, %s43
    %p54 = scmp.eq.s32.totalorder %s13, 0
    %p55 = por %p53, %p54
    %p56 = scmp.ne.s32.totalorder %s42, %s43
    %p57 = scmp.eq.s32.totalorder %s14, 1
    %p58 = por %p56, %p57
    %p60 = scmp.ne.s32.totalorder %s43, %s59
    %p61 = scmp.eq.s32.totalorder %s14, 0
    %p62 = por %p60, %p61
    %s63 = ssub.s32 %s17, %s26
    %s64 = ssub.s32 %s16, %s30
    %s65 = sor.u32 %s63, %s64
    %p66 = scmp.eq.s32.totalorder %s65, 0
    %s68 = sadd.s32 %s67, 1
    %s69 = scalar_select %p66, %s67, %s68
    %p72 = pneg %p66
    %p73 = scmp.eq.s32.totalorder %s8, 1
    %p74 = por %p72, %p73
    %p75 = scmp.ne.s32.totalorder %s67, %s70
    %p76 = scmp.eq.s32.totalorder %s8, 0
    %p77 = por %p75, %p76
    %p78 = scmp.ne.s32.totalorder %s67, %s70
    %p79 = scmp.eq.s32.totalorder %s13, 1
    %p80 = por %p78, %p79
    %p81 = scmp.ne.s32.totalorder %s70, %s71
    %p82 = scmp.eq.s32.totalorder %s13, 0
    %p83 = por %p81, %p82
    %p84 = scmp.ne.s32.totalorder %s70, %s71
    %p85 = scmp.eq.s32.totalorder %s14, 1
    %p86 = por %p84, %p85
    %p88 = scmp.ne.s32.totalorder %s71, %s87
    %p89 = scmp.eq.s32.totalorder %s14, 0
    %p90 = por %p88, %p89
    %s91 = ssub.s32 %s15, %s34
    %s92 = ssub.s32 %s16, %s30
    %s93 = sor.u32 %s91, %s92
    %p94 = scmp.eq.s32.totalorder %s93, 0
    %s96 = sadd.s32 %s95, 1
    %s97 = scalar_select %p94, %s95, %s96
    %p100 = pneg %p94
    %p101 = scmp.eq.s32.totalorder %s8, 1
    %p102 = por %p100, %p101
    %p103 = scmp.ne.s32.totalorder %s95, %s98
    %p104 = scmp.eq.s32.totalorder %s8, 0
    %p105 = por %p103, %p104
    %p106 = scmp.ne.s32.totalorder %s95, %s98
    %p107 = scmp.eq.s32.totalorder %s13, 1
    %p108 = por %p106, %p107
    %p109 = scmp.ne.s32.totalorder %s98, %s99
    %p110 = scmp.eq.s32.totalorder %s13, 0
    %p111 = por %p109, %p110
    %p112 = scmp.ne.s32.totalorder %s98, %s99
    %p113 = scmp.eq.s32.totalorder %s14, 1
    %p114 = por %p112, %p113
    %p116 = scmp.ne.s32.totalorder %s99, %s115
    %p117 = scmp.eq.s32.totalorder %s14, 0
    %p118 = por %p116, %p117
    %p119 = scmp.le.s32.totalorder 1, %s8
    %p120 = scmp.lt.s32.totalorder %s8, 3
    %p121 = pnand %p119, %p120
    %p122 = pneg %p121
    // Predicated region
    $region9: #{generator_forward.7} parent=5 // pred_check
      _
    $region10: #{generator_forward.7} parent=5 // pred_check_branch
      %124 = sbr.rel (%p121) target = $region12
    $region11: #{generator_forward.7} parent=5 // pred_region
      %s125 = ssub.s32 %s8, 1
      // Predicated region
      $region13: #{generator_forward.7} parent=11 // pred_check
        %p126 = pneg %p83
      $region14: #{generator_forward.7} parent=11 // pred_check_branch
        %128 = sbr.rel (%p126) target = $region16
      $region15: #{generator_forward.7} parent=11 // pred_region
        %s129 = smul.u32 2, %s20
        %p130 = scmp.lt.s32.totalorder %s129, 1
        %s131 = scalar_select %p130, %s129, 1
        %p132 = scmp.lt.s32.totalorder %s19, 0
        %s133 = scalar_select %p132, %s19, 0
        %s134 = sadd.s32 %s133, %s131
        %s135 = smul.addr %s134, 4
        %s136 = scalar_lea.vmem %s1, %s135
        %s137 = smul.u32 2, %s20
      $region16: #{generator_forward.7} parent=11 // pred_fallthru
        _
    $region12: #{generator_forward.7} parent=5 // pred_fallthru
      _
    %p138 = scmp.lt.s32.totalorder %s8, 2
    // Predicated region
    $region17: #{generator_forward.7} parent=5 // pred_check
      %p139 = pneg %p138
    $region18: #{generator_forward.7} parent=5 // pred_check_branch
      %141 = sbr.rel (%p139) target = $region20
    $region19: #{generator_forward.7} parent=5 // pred_region
      // Predicated region
      $region21: #{generator_forward.7} parent=19 // pred_check
        %p142 = pneg %p49
      $region22: #{generator_forward.7} parent=19 // pred_check_branch
        %144 = sbr.rel (%p142) target = $region24
      $region23: #{generator_forward.7} parent=19 // pred_region
        %s145 = smul.u32 32, %s15
        %p146 = scmp.lt.s32.totalorder %s145, 63
        %s147 = scalar_select %p146, %s145, 63
        %p148 = scmp.lt.s32.totalorder %s17, 0
        %s149 = scalar_select %p148, %s17, 0
        %s150 = sadd.s32 %s149, %s147
        %s151 = smul.addr %s150, 8
        %s152 = scalar_lea.vmem %s0, %s151
        %s153 = smul.u32 32, %s15
      $region24: #{generator_forward.7} parent=19 // pred_fallthru
        _
    $region20: #{generator_forward.7} parent=5 // pred_fallthru
      _
    %p154 = scmp.le.s32.totalorder 1, %s8
    %p155 = scmp.lt.s32.totalorder %s8, 3
    %p156 = pnand %p154, %p155
    %p157 = pneg %p156
    // Predicated region
    $region25: #{generator_forward.7} parent=5 // pred_check
      _
    $region26: #{generator_forward.7} parent=5 // pred_check_branch
      %159 = sbr.rel (%p156) target = $region28
    $region27: #{generator_forward.7} parent=5 // pred_region
      %s160 = ssub.s32 %s8, 1
      %s161 = smul.u32 32, %s18
      %p162 = scmp.lt.s32.totalorder %s161, 63
      %s163 = scalar_select %p162, %s161, 63
      %p164 = scmp.lt.s32.totalorder %s20, 0
      %s165 = scalar_select %p164, %s20, 0
      %s166 = sadd.s32 %s165, %s163
      %s167 = smul.addr %s166, 8
      %s168 = scalar_lea.vmem %s0, %s167
      %p169 = pneg %p55
      %p170 = pneg %p52
      %s171 = smul.u32 2, %s20
      %p172 = scmp.lt.s32.totalorder %s171, 1
      %s173 = scalar_select %p172, %s171, 1
      %p174 = scmp.lt.s32.totalorder %s19, 0
      %s175 = scalar_select %p174, %s19, 0
      %s176 = sadd.s32 %s175, %s173
      %s177 = smul.addr %s176, 4
      %s178 = scalar_lea.vmem %s1, %s177
      %p179 = pneg %p83
      %p180 = pneg %p80
      %p181 = pneg %p111
      %p182 = pneg %p108
      %s183 = smul.u32 32, %s18
      %p184 = scmp.lt.s32.totalorder %s183, 63
      %s185 = scalar_select %p184, %s183, 63
      %p186 = scmp.lt.s32.totalorder %s19, 0
      %s187 = scalar_select %p186, %s19, 0
      %s188 = sadd.s32 %s187, %s185
      %s189 = smul.addr %s188, 8
      %s190 = scalar_lea.vmem %s2, %s189
      %s191 = smul.u32 32, %s18
      %p192 = scmp.lt.s32.totalorder %s191, 63
      %s193 = scalar_select %p192, %s191, 63
      %p194 = scmp.lt.s32.totalorder %s20, 0
      %s195 = scalar_select %p194, %s20, 0
      %s196 = sadd.s32 %s195, %s193
      %s197 = smul.addr %s196, 8
      %s198 = scalar_lea.vmem %s0, %s197
      %s199 = smul.u32 32, %s18
      %s200 = smul.u32 2, %s20
      %p201 = scmp.lt.s32.totalorder %s200, 1
      %s202 = scalar_select %p201, %s200, 1
      %p203 = scmp.lt.s32.totalorder %s19, 0
      %s204 = scalar_select %p203, %s19, 0
      %s205 = sadd.s32 %s204, %s202
      %s206 = smul.addr %s205, 4
      %s207 = scalar_lea.vmem %s1, %s206
      %s208 = smul.u32 2, %s20
      %s209 = smul.u32 32, %s18
      %p210 = scmp.lt.s32.totalorder %s209, 63
      %s211 = scalar_select %p210, %s209, 63
      %p212 = scmp.lt.s32.totalorder %s19, 0
      %s213 = scalar_select %p212, %s19, 0
      %s214 = sadd.s32 %s213, %s211
      %s215 = smul.addr %s214, 8
      %s216 = scalar_lea.vmem %s2, %s215
      %s217 = smul.u32 32, %s18
      %p219 = scmp.eq.s32.totalorder %s20, 0
      // Predicated region
      $region29: #{generator_forward.7} parent=27 // pred_check
        %p220 = pneg %p219
      $region30: #{generator_forward.7} parent=27 // pred_check_branch
        %222 = sbr.rel (%p220) target = $region32
      $region31: #{generator_forward.7} parent=27 // pred_region
        %223 = vst [vmem:[#allocation2] sm:$0xff] 0.0
        %224 = vst [vmem:[#allocation2 + $0x8] sm:$0xff] 0.0
        %225 = vst [vmem:[#allocation2 + $0x10] sm:$0xff] 0.0
        %226 = vst [vmem:[#allocation2 + $0x18] sm:$0xff] 0.0
        %227 = vst [vmem:[#allocation2 + $0x20] sm:$0xff] 0.0
        %228 = vst [vmem:[#allocation2 + $0x28] sm:$0xff] 0.0
        %229 = vst [vmem:[#allocation2 + $0x30] sm:$0xff] 0.0
        %230 = vst [vmem:[#allocation2 + $0x38] sm:$0xff] 0.0
        %231 = vst [vmem:[#allocation2 + $0x40] sm:$0xff] 0.0
        %232 = vst [vmem:[#allocation2 + $0x48] sm:$0xff] 0.0
        %233 = vst [vmem:[#allocation2 + $0x50] sm:$0xff] 0.0
        %234 = vst [vmem:[#allocation2 + $0x58] sm:$0xff] 0.0
        %235 = vst [vmem:[#allocation2 + $0x60] sm:$0xff] 0.0
        %236 = vst [vmem:[#allocation2 + $0x68] sm:$0xff] 0.0
        %237 = vst [vmem:[#allocation2 + $0x70] sm:$0xff] 0.0
        %238 = vst [vmem:[#allocation2 + $0x78] sm:$0xff] 0.0
        %239 = vst [vmem:[#allocation2 + $0x80] sm:$0xff] 0.0
        %240 = vst [vmem:[#allocation2 + $0x88] sm:$0xff] 0.0
        %241 = vst [vmem:[#allocation2 + $0x90] sm:$0xff] 0.0
        %242 = vst [vmem:[#allocation2 + $0x98] sm:$0xff] 0.0
        %243 = vst [vmem:[#allocation2 + $0xa0] sm:$0xff] 0.0
        %244 = vst [vmem:[#allocation2 + $0xa8] sm:$0xff] 0.0
        %245 = vst [vmem:[#allocation2 + $0xb0] sm:$0xff] 0.0
        %246 = vst [vmem:[#allocation2 + $0xb8] sm:$0xff] 0.0
        %247 = vst [vmem:[#allocation2 + $0xc0] sm:$0xff] 0.0
        %248 = vst [vmem:[#allocation2 + $0xc8] sm:$0xff] 0.0
        %249 = vst [vmem:[#allocation2 + $0xd0] sm:$0xff] 0.0
        %250 = vst [vmem:[#allocation2 + $0xd8] sm:$0xff] 0.0
        %251 = vst [vmem:[#allocation2 + $0xe0] sm:$0xff] 0.0
        %252 = vst [vmem:[#allocation2 + $0xe8] sm:$0xff] 0.0
        %253 = vst [vmem:[#allocation2 + $0xf0] sm:$0xff] 0.0
        %254 = vst [vmem:[#allocation2 + $0xf8] sm:$0xff] 0.0
      $region32: #{generator_forward.7} parent=27 // pred_fallthru
        _
      %v255 = vld [vmem:[%s198] sm:$0xff]
      %v256 = vld [vmem:[%s198 + $0x8] sm:$0xff]
      %v257 = vld [vmem:[%s198 + $0x10] sm:$0xff]
      %v258 = vld [vmem:[%s198 + $0x18] sm:$0xff]
      %v259 = vld [vmem:[%s198 + $0x20] sm:$0xff]
      %v260 = vld [vmem:[%s198 + $0x28] sm:$0xff]
      %v261 = vld [vmem:[%s198 + $0x30] sm:$0xff]
      %v262 = vld [vmem:[%s198 + $0x38] sm:$0xff]
      %v263 = vld [vmem:[%s198 + $0x40] sm:$0xff]
      %v264 = vld [vmem:[%s198 + $0x48] sm:$0xff]
      %v265 = vld [vmem:[%s198 + $0x50] sm:$0xff]
      %v266 = vld [vmem:[%s198 + $0x58] sm:$0xff]
      %v267 = vld [vmem:[%s198 + $0x60] sm:$0xff]
      %v268 = vld [vmem:[%s198 + $0x68] sm:$0xff]
      %v269 = vld [vmem:[%s198 + $0x70] sm:$0xff]
      %v270 = vld [vmem:[%s198 + $0x78] sm:$0xff]
      %v271 = vld [vmem:[%s198 + $0x80] sm:$0xff]
      %v272 = vld [vmem:[%s198 + $0x88] sm:$0xff]
      %v273 = vld [vmem:[%s198 + $0x90] sm:$0xff]
      %v274 = vld [vmem:[%s198 + $0x98] sm:$0xff]
      %v275 = vld [vmem:[%s198 + $0xa0] sm:$0xff]
      %v276 = vld [vmem:[%s198 + $0xa8] sm:$0xff]
      %v277 = vld [vmem:[%s198 + $0xb0] sm:$0xff]
      %v278 = vld [vmem:[%s198 + $0xb8] sm:$0xff]
      %v279 = vld [vmem:[%s198 + $0xc0] sm:$0xff]
      %v280 = vld [vmem:[%s198 + $0xc8] sm:$0xff]
      %v281 = vld [vmem:[%s198 + $0xd0] sm:$0xff]
      %v282 = vld [vmem:[%s198 + $0xd8] sm:$0xff]
      %v283 = vld [vmem:[%s198 + $0xe0] sm:$0xff]
      %v284 = vld [vmem:[%s198 + $0xe8] sm:$0xff]
      %v285 = vld [vmem:[%s198 + $0xf0] sm:$0xff]
      %v286 = vld [vmem:[%s198 + $0xf8] sm:$0xff]
      %vm287 = vcmp.ge.f32.partialorder %v255, 0.0
      %vm288 = vcmp.ge.f32.partialorder %v256, 0.0
      %vm289 = vcmp.ge.f32.partialorder %v257, 0.0
      %vm290 = vcmp.ge.f32.partialorder %v258, 0.0
      %vm291 = vcmp.ge.f32.partialorder %v259, 0.0
      %vm292 = vcmp.ge.f32.partialorder %v260, 0.0
      %vm293 = vcmp.ge.f32.partialorder %v261, 0.0
      %vm294 = vcmp.ge.f32.partialorder %v262, 0.0
      %vm295 = vcmp.ge.f32.partialorder %v263, 0.0
      %vm296 = vcmp.ge.f32.partialorder %v264, 0.0
      %vm297 = vcmp.ge.f32.partialorder %v265, 0.0
      %vm298 = vcmp.ge.f32.partialorder %v266, 0.0
      %vm299 = vcmp.ge.f32.partialorder %v267, 0.0
      %vm300 = vcmp.ge.f32.partialorder %v268, 0.0
      %vm301 = vcmp.ge.f32.partialorder %v269, 0.0
      %vm302 = vcmp.ge.f32.partialorder %v270, 0.0
      %vm303 = vcmp.ge.f32.partialorder %v271, 0.0
      %vm304 = vcmp.ge.f32.partialorder %v272, 0.0
      %vm305 = vcmp.ge.f32.partialorder %v273, 0.0
      %vm306 = vcmp.ge.f32.partialorder %v274, 0.0
      %vm307 = vcmp.ge.f32.partialorder %v275, 0.0
      %vm308 = vcmp.ge.f32.partialorder %v276, 0.0
      %vm309 = vcmp.ge.f32.partialorder %v277, 0.0
      %vm310 = vcmp.ge.f32.partialorder %v278, 0.0
      %vm311 = vcmp.ge.f32.partialorder %v279, 0.0
      %vm312 = vcmp.ge.f32.partialorder %v280, 0.0
      %vm313 = vcmp.ge.f32.partialorder %v281, 0.0
      %vm314 = vcmp.ge.f32.partialorder %v282, 0.0
      %vm315 = vcmp.ge.f32.partialorder %v283, 0.0
      %vm316 = vcmp.ge.f32.partialorder %v284, 0.0
      %vm317 = vcmp.ge.f32.partialorder %v285, 0.0
      %vm318 = vcmp.ge.f32.partialorder %v286, 0.0
      %v319 = vmul.f32 %v255, 0.01
      %v320 = vmul.f32 %v256, 0.01
      %v321 = vmul.f32 %v257, 0.01
      %v322 = vmul.f32 %v258, 0.01
      %v323 = vmul.f32 %v259, 0.01
      %v324 = vmul.f32 %v260, 0.01
      %v325 = vmul.f32 %v261, 0.01
      %v326 = vmul.f32 %v262, 0.01
      %v327 = vmul.f32 %v263, 0.01
      %v328 = vmul.f32 %v264, 0.01
      %v329 = vmul.f32 %v265, 0.01
      %v330 = vmul.f32 %v266, 0.01
      %v331 = vmul.f32 %v267, 0.01
      %v332 = vmul.f32 %v268, 0.01
      %v333 = vmul.f32 %v269, 0.01
      %v334 = vmul.f32 %v270, 0.01
      %v335 = vmul.f32 %v271, 0.01
      %v336 = vmul.f32 %v272, 0.01
      %v337 = vmul.f32 %v273, 0.01
      %v338 = vmul.f32 %v274, 0.01
      %v339 = vmul.f32 %v275, 0.01
      %v340 = vmul.f32 %v276, 0.01
      %v341 = vmul.f32 %v277, 0.01
      %v342 = vmul.f32 %v278, 0.01
      %v343 = vmul.f32 %v279, 0.01
      %v344 = vmul.f32 %v280, 0.01
      %v345 = vmul.f32 %v281, 0.01
      %v346 = vmul.f32 %v282, 0.01
      %v347 = vmul.f32 %v283, 0.01
      %v348 = vmul.f32 %v284, 0.01
      %v349 = vmul.f32 %v285, 0.01
      %v350 = vmul.f32 %v286, 0.01
      %v351 = vsel %vm287, %v255, %v319
      %v352 = vsel %vm288, %v256, %v320
      %v353 = vsel %vm289, %v257, %v321
      %v354 = vsel %vm290, %v258, %v322
      %v355 = vsel %vm291, %v259, %v323
      %v356 = vsel %vm292, %v260, %v324
      %v357 = vsel %vm293, %v261, %v325
      %v358 = vsel %vm294, %v262, %v326
      %v359 = vsel %vm295, %v263, %v327
      %v360 = vsel %vm296, %v264, %v328
      %v361 = vsel %vm297, %v265, %v329
      %v362 = vsel %vm298, %v266, %v330
      %v363 = vsel %vm299, %v267, %v331
      %v364 = vsel %vm300, %v268, %v332
      %v365 = vsel %vm301, %v269, %v333
      %v366 = vsel %vm302, %v270, %v334
      %v367 = vsel %vm303, %v271, %v335
      %v368 = vsel %vm304, %v272, %v336
      %v369 = vsel %vm305, %v273, %v337
      %v370 = vsel %vm306, %v274, %v338
      %v371 = vsel %vm307, %v275, %v339
      %v372 = vsel %vm308, %v276, %v340
      %v373 = vsel %vm309, %v277, %v341
      %v374 = vsel %vm310, %v278, %v342
      %v375 = vsel %vm311, %v279, %v343
      %v376 = vsel %vm312, %v280, %v344
      %v377 = vsel %vm313, %v281, %v345
      %v378 = vsel %vm314, %v282, %v346
      %v379 = vsel %vm315, %v283, %v347
      %v380 = vsel %vm316, %v284, %v348
      %v381 = vsel %vm317, %v285, %v349
      %v382 = vsel %vm318, %v286, %v350
      %v383 = vld [vmem:[#allocation2] sm:$0xff]
      %v384 = vld [vmem:[#allocation2 + $0x8] sm:$0xff]
      %v385 = vld [vmem:[#allocation2 + $0x10] sm:$0xff]
      %v386 = vld [vmem:[#allocation2 + $0x18] sm:$0xff]
      %v387 = vld [vmem:[#allocation2 + $0x20] sm:$0xff]
      %v388 = vld [vmem:[#allocation2 + $0x28] sm:$0xff]
      %v389 = vld [vmem:[#allocation2 + $0x30] sm:$0xff]
      %v390 = vld [vmem:[#allocation2 + $0x38] sm:$0xff]
      %v391 = vld [vmem:[#allocation2 + $0x40] sm:$0xff]
      %v392 = vld [vmem:[#allocation2 + $0x48] sm:$0xff]
      %v393 = vld [vmem:[#allocation2 + $0x50] sm:$0xff]
      %v394 = vld [vmem:[#allocation2 + $0x58] sm:$0xff]
      %v395 = vld [vmem:[#allocation2 + $0x60] sm:$0xff]
      %v396 = vld [vmem:[#allocation2 + $0x68] sm:$0xff]
      %v397 = vld [vmem:[#allocation2 + $0x70] sm:$0xff]
      %v398 = vld [vmem:[#allocation2 + $0x78] sm:$0xff]
      %v399 = vld [vmem:[#allocation2 + $0x80] sm:$0xff]
      %v400 = vld [vmem:[#allocation2 + $0x88] sm:$0xff]
      %v401 = vld [vmem:[#allocation2 + $0x90] sm:$0xff]
      %v402 = vld [vmem:[#allocation2 + $0x98] sm:$0xff]
      %v403 = vld [vmem:[#allocation2 + $0xa0] sm:$0xff]
      %v404 = vld [vmem:[#allocation2 + $0xa8] sm:$0xff]
      %v405 = vld [vmem:[#allocation2 + $0xb0] sm:$0xff]
      %v406 = vld [vmem:[#allocation2 + $0xb8] sm:$0xff]
      %v407 = vld [vmem:[#allocation2 + $0xc0] sm:$0xff]
      %v408 = vld [vmem:[#allocation2 + $0xc8] sm:$0xff]
      %v409 = vld [vmem:[#allocation2 + $0xd0] sm:$0xff]
      %v410 = vld [vmem:[#allocation2 + $0xd8] sm:$0xff]
      %v411 = vld [vmem:[#allocation2 + $0xe0] sm:$0xff]
      %v412 = vld [vmem:[#allocation2 + $0xe8] sm:$0xff]
      %v413 = vld [vmem:[#allocation2 + $0xf0] sm:$0xff]
      %v414 = vld [vmem:[#allocation2 + $0xf8] sm:$0xff]
      %v415 = vpack.c.bf16 %v352, %v351
      %v416 = vpack.c.bf16 %v354, %v353
      %v417 = vpack.c.bf16 %v356, %v355
      %v418 = vpack.c.bf16 %v358, %v357
      %v419 = vpack.c.bf16 %v360, %v359
      %v420 = vpack.c.bf16 %v362, %v361
      %v421 = vpack.c.bf16 %v364, %v363
      %v422 = vpack.c.bf16 %v366, %v365
      %v423 = vpack.c.bf16 %v368, %v367
      %v424 = vpack.c.bf16 %v370, %v369
      %v425 = vpack.c.bf16 %v372, %v371
      %v426 = vpack.c.bf16 %v374, %v373
      %v427 = vpack.c.bf16 %v376, %v375
      %v428 = vpack.c.bf16 %v378, %v377
      %v429 = vpack.c.bf16 %v380, %v379
      %v430 = vpack.c.bf16 %v382, %v381
      %v431 = vld [vmem:[%s207] sm:$0xf]
      %v432 = vld [vmem:[%s207 + $0x4] sm:$0xf]
      %v435 = vunpack.c.l.b16 %v431
      %v436 = vunpack.c.l.b16 %v432
      %v437 = vpack.c.b16 %v436, %v435
      %vm439 = vcmask 130048
      %v441 = vsel %vm439, %v415, 0
      %v444 = vsel %vm439, %v416, 0
      %v447 = vsel %vm439, %v417, 0
      %v450 = vsel %vm439, %v418, 0
      %v453 = vsel %vm439, %v419, 0
      %v456 = vsel %vm439, %v420, 0
      %v459 = vsel %vm439, %v421, 0
      %v462 = vsel %vm439, %v422, 0
      %v465 = vsel %vm439, %v423, 0
      %v468 = vsel %vm439, %v424, 0
      %v471 = vsel %vm439, %v425, 0
      %v474 = vsel %vm439, %v426, 0
      %v477 = vsel %vm439, %v427, 0
      %v480 = vsel %vm439, %v428, 0
      %v483 = vsel %vm439, %v429, 0
      %v486 = vsel %vm439, %v430, 0
      %488 = vmatprep.subr.bf16.mxu0 0
      %489 = vmatpush1.bf16.msra.mxu0 0
      %490 = vmatprep.subr.bf16.mxu0 0
      %491 = vmatpush1.bf16.msra.mxu0 0
      %492 = vmatprep.subr.bf16.mxu0 0
      %493 = vmatpush1.bf16.msra.mxu0 0
      %494 = vmatprep.subr.bf16.mxu0 0
      %495 = vmatpush1.bf16.msra.mxu0 0
      %496 = vmatprep.subr.bf16.mxu0 0
      %497 = vmatpush1.bf16.msra.mxu0 0
      %498 = vmatprep.subr.bf16.mxu0 0
      %499 = vmatpush1.bf16.msra.mxu0 0
      %500 = vmatprep.subr.bf16.mxu0 0
      %501 = vmatpush1.bf16.msra.mxu0 0
      %502 = vmatprep.subr.bf16.mxu0 0
      %503 = vmatpush1.bf16.msra.mxu0 %v437
      %504 = vmatprep.subr.bf16.mxu0 0
      %505 = vmatpush2.bf16.msra.mxu0 0
      %506 = vmatprep.subr.bf16.mxu0 0
      %507 = vmatpush2.bf16.msra.mxu0 0
      %508 = vmatprep.subr.bf16.mxu0 0
      %509 = vmatpush2.bf16.msra.mxu0 0
      %510 = vmatprep.subr.bf16.mxu0 0
      %511 = vmatpush2.bf16.msra.mxu0 0
      %512 = vmatprep.subr.bf16.mxu0 0
      %513 = vmatpush2.bf16.msra.mxu0 0
      %514 = vmatprep.subr.bf16.mxu0 0
      %515 = vmatpush2.bf16.msra.mxu0 0
      %516 = vmatprep.subr.bf16.mxu0 0
      %517 = vmatpush2.bf16.msra.mxu0 0
      %518 = vmatprep.subr.bf16.mxu0 0
      %519 = vmatpush2.bf16.msra.mxu0 0
      %520 = vmatprep.mubr.bf16.mxu0 0
      %521 = vmatmul.mubr.bf16.gmra.mxu0 %v441
      %v522 = vpop.f32.mrf.mxu0
      %v523 = vadd.f32 0.0, %v522
      %v524 = vpop.f32.mrf.mxu0
      %v525 = vpop.f32.mrf.mxu0
      %v526 = vadd.f32 0.0, %v525
      %v527 = vpop.f32.mrf.mxu0
      %528 = vmatprep.mubr.bf16.mxu0 0
      %529 = vmatmul.mubr.bf16.gmra.mxu0 %v444
      %v530 = vpop.f32.mrf.mxu0
      %v531 = vadd.f32 0.0, %v530
      %v532 = vpop.f32.mrf.mxu0
      %v533 = vpop.f32.mrf.mxu0
      %v534 = vadd.f32 0.0, %v533
      %v535 = vpop.f32.mrf.mxu0
      %536 = vmatprep.mubr.bf16.mxu0 0
      %537 = vmatmul.mubr.bf16.gmra.mxu0 %v447
      %v538 = vpop.f32.mrf.mxu0
      %v539 = vadd.f32 0.0, %v538
      %v540 = vpop.f32.mrf.mxu0
      %v541 = vpop.f32.mrf.mxu0
      %v542 = vadd.f32 0.0, %v541
      %v543 = vpop.f32.mrf.mxu0
      %544 = vmatprep.mubr.bf16.mxu0 0
      %545 = vmatmul.mubr.bf16.gmra.mxu0 %v450
      %v546 = vpop.f32.mrf.mxu0
      %v547 = vadd.f32 0.0, %v546
      %v548 = vpop.f32.mrf.mxu0
      %v549 = vpop.f32.mrf.mxu0
      %v550 = vadd.f32 0.0, %v549
      %v551 = vpop.f32.mrf.mxu0
      %552 = vmatprep.mubr.bf16.mxu0 0
      %553 = vmatmul.mubr.bf16.gmra.mxu0 %v453
      %v554 = vpop.f32.mrf.mxu0
      %v555 = vadd.f32 0.0, %v554
      %v556 = vpop.f32.mrf.mxu0
      %v557 = vpop.f32.mrf.mxu0
      %v558 = vadd.f32 0.0, %v557
      %v559 = vpop.f32.mrf.mxu0
      %560 = vmatprep.mubr.bf16.mxu0 0
      %561 = vmatmul.mubr.bf16.gmra.mxu0 %v456
      %v562 = vpop.f32.mrf.mxu0
      %v563 = vadd.f32 0.0, %v562
      %v564 = vpop.f32.mrf.mxu0
      %v565 = vpop.f32.mrf.mxu0
      %v566 = vadd.f32 0.0, %v565
      %v567 = vpop.f32.mrf.mxu0
      %568 = vmatprep.mubr.bf16.mxu0 0
      %569 = vmatmul.mubr.bf16.gmra.mxu0 %v459
      %v570 = vpop.f32.mrf.mxu0
      %v571 = vadd.f32 0.0, %v570
      %v572 = vpop.f32.mrf.mxu0
      %v573 = vpop.f32.mrf.mxu0
      %v574 = vadd.f32 0.0, %v573
      %v575 = vpop.f32.mrf.mxu0
      %576 = vmatprep.mubr.bf16.mxu0 0
      %577 = vmatmul.mubr.bf16.gmra.mxu0 %v462
      %v578 = vpop.f32.mrf.mxu0
      %v579 = vadd.f32 0.0, %v578
      %v580 = vpop.f32.mrf.mxu0
      %v581 = vpop.f32.mrf.mxu0
      %v582 = vadd.f32 0.0, %v581
      %v583 = vpop.f32.mrf.mxu0
      %584 = vmatprep.mubr.bf16.mxu0 0
      %585 = vmatmul.mubr.bf16.gmra.mxu0 %v465
      %v586 = vpop.f32.mrf.mxu0
      %v587 = vadd.f32 0.0, %v586
      %v588 = vpop.f32.mrf.mxu0
      %v589 = vpop.f32.mrf.mxu0
      %v590 = vadd.f32 0.0, %v589
      %v591 = vpop.f32.mrf.mxu0
      %592 = vmatprep.mubr.bf16.mxu0 0
      %593 = vmatmul.mubr.bf16.gmra.mxu0 %v468
      %v594 = vpop.f32.mrf.mxu0
      %v595 = vadd.f32 0.0, %v594
      %v596 = vpop.f32.mrf.mxu0
      %v597 = vpop.f32.mrf.mxu0
      %v598 = vadd.f32 0.0, %v597
      %v599 = vpop.f32.mrf.mxu0
      %600 = vmatprep.mubr.bf16.mxu0 0
      %601 = vmatmul.mubr.bf16.gmra.mxu0 %v471
      %v602 = vpop.f32.mrf.mxu0
      %v603 = vadd.f32 0.0, %v602
      %v604 = vpop.f32.mrf.mxu0
      %v605 = vpop.f32.mrf.mxu0
      %v606 = vadd.f32 0.0, %v605
      %v607 = vpop.f32.mrf.mxu0
      %608 = vmatprep.mubr.bf16.mxu0 0
      %609 = vmatmul.mubr.bf16.gmra.mxu0 %v474
      %v610 = vpop.f32.mrf.mxu0
      %v611 = vadd.f32 0.0, %v610
      %v612 = vpop.f32.mrf.mxu0
      %v613 = vpop.f32.mrf.mxu0
      %v614 = vadd.f32 0.0, %v613
      %v615 = vpop.f32.mrf.mxu0
      %616 = vmatprep.mubr.bf16.mxu0 0
      %617 = vmatmul.mubr.bf16.gmra.mxu0 %v477
      %v618 = vpop.f32.mrf.mxu0
      %v619 = vadd.f32 0.0, %v618
      %v620 = vpop.f32.mrf.mxu0
      %v621 = vpop.f32.mrf.mxu0
      %v622 = vadd.f32 0.0, %v621
      %v623 = vpop.f32.mrf.mxu0
      %624 = vmatprep.mubr.bf16.mxu0 0
      %625 = vmatmul.mubr.bf16.gmra.mxu0 %v480
      %v626 = vpop.f32.mrf.mxu0
      %v627 = vadd.f32 0.0, %v626
      %v628 = vpop.f32.mrf.mxu0
      %v629 = vpop.f32.mrf.mxu0
      %v630 = vadd.f32 0.0, %v629
      %v631 = vpop.f32.mrf.mxu0
      %632 = vmatprep.mubr.bf16.mxu0 0
      %633 = vmatmul.mubr.bf16.gmra.mxu0 %v483
      %v634 = vpop.f32.mrf.mxu0
      %v635 = vadd.f32 0.0, %v634
      %v636 = vpop.f32.mrf.mxu0
      %v637 = vpop.f32.mrf.mxu0
      %v638 = vadd.f32 0.0, %v637
      %v639 = vpop.f32.mrf.mxu0
      %640 = vmatprep.mubr.bf16.mxu0 0
      %641 = vmatmul.mubr.bf16.gmra.mxu0 %v486
      %v642 = vpop.f32.mrf.mxu0
      %v643 = vadd.f32 0.0, %v642
      %v644 = vpop.f32.mrf.mxu0
      %v645 = vpop.f32.mrf.mxu0
      %v646 = vadd.f32 0.0, %v645
      %v647 = vpop.f32.mrf.mxu0
      %648 = vdwg.mxu0
      %v649 = vadd.f32 %v383, %v523
      %v650 = vadd.f32 %v384, %v526
      %v651 = vadd.f32 %v385, %v531
      %v652 = vadd.f32 %v386, %v534
      %v653 = vadd.f32 %v387, %v539
      %v654 = vadd.f32 %v388, %v542
      %v655 = vadd.f32 %v389, %v547
      %v656 = vadd.f32 %v390, %v550
      %v657 = vadd.f32 %v391, %v555
      %v658 = vadd.f32 %v392, %v558
      %v659 = vadd.f32 %v393, %v563
      %v660 = vadd.f32 %v394, %v566
      %v661 = vadd.f32 %v395, %v571
      %v662 = vadd.f32 %v396, %v574
      %v663 = vadd.f32 %v397, %v579
      %v664 = vadd.f32 %v398, %v582
      %v665 = vadd.f32 %v399, %v587
      %v666 = vadd.f32 %v400, %v590
      %v667 = vadd.f32 %v401, %v595
      %v668 = vadd.f32 %v402, %v598
      %v669 = vadd.f32 %v403, %v603
      %v670 = vadd.f32 %v404, %v606
      %v671 = vadd.f32 %v405, %v611
      %v672 = vadd.f32 %v406, %v614
      %v673 = vadd.f32 %v407, %v619
      %v674 = vadd.f32 %v408, %v622
      %v675 = vadd.f32 %v409, %v627
      %v676 = vadd.f32 %v410, %v630
      %v677 = vadd.f32 %v411, %v635
      %v678 = vadd.f32 %v412, %v638
      %v679 = vadd.f32 %v413, %v643
      %v680 = vadd.f32 %v414, %v646
      %681 = vst [vmem:[#allocation2] sm:$0xff] %v649
      %682 = vst [vmem:[#allocation2 + $0x8] sm:$0xff] %v650
      %683 = vst [vmem:[#allocation2 + $0x10] sm:$0xff] %v651
      %684 = vst [vmem:[#allocation2 + $0x18] sm:$0xff] %v652
      %685 = vst [vmem:[#allocation2 + $0x20] sm:$0xff] %v653
      %686 = vst [vmem:[#allocation2 + $0x28] sm:$0xff] %v654
      %687 = vst [vmem:[#allocation2 + $0x30] sm:$0xff] %v655
      %688 = vst [vmem:[#allocation2 + $0x38] sm:$0xff] %v656
      %689 = vst [vmem:[#allocation2 + $0x40] sm:$0xff] %v657
      %690 = vst [vmem:[#allocation2 + $0x48] sm:$0xff] %v658
      %691 = vst [vmem:[#allocation2 + $0x50] sm:$0xff] %v659
      %692 = vst [vmem:[#allocation2 + $0x58] sm:$0xff] %v660
      %693 = vst [vmem:[#allocation2 + $0x60] sm:$0xff] %v661
      %694 = vst [vmem:[#allocation2 + $0x68] sm:$0xff] %v662
      %695 = vst [vmem:[#allocation2 + $0x70] sm:$0xff] %v663
      %696 = vst [vmem:[#allocation2 + $0x78] sm:$0xff] %v664
      %697 = vst [vmem:[#allocation2 + $0x80] sm:$0xff] %v665
      %698 = vst [vmem:[#allocation2 + $0x88] sm:$0xff] %v666
      %699 = vst [vmem:[#allocation2 + $0x90] sm:$0xff] %v667
      %700 = vst [vmem:[#allocation2 + $0x98] sm:$0xff] %v668
      %701 = vst [vmem:[#allocation2 + $0xa0] sm:$0xff] %v669
      %702 = vst [vmem:[#allocation2 + $0xa8] sm:$0xff] %v670
      %703 = vst [vmem:[#allocation2 + $0xb0] sm:$0xff] %v671
      %704 = vst [vmem:[#allocation2 + $0xb8] sm:$0xff] %v672
      %705 = vst [vmem:[#allocation2 + $0xc0] sm:$0xff] %v673
      %706 = vst [vmem:[#allocation2 + $0xc8] sm:$0xff] %v674
      %707 = vst [vmem:[#allocation2 + $0xd0] sm:$0xff] %v675
      %708 = vst [vmem:[#allocation2 + $0xd8] sm:$0xff] %v676
      %709 = vst [vmem:[#allocation2 + $0xe0] sm:$0xff] %v677
      %710 = vst [vmem:[#allocation2 + $0xe8] sm:$0xff] %v678
      %711 = vst [vmem:[#allocation2 + $0xf0] sm:$0xff] %v679
      %712 = vst [vmem:[#allocation2 + $0xf8] sm:$0xff] %v680
      // Predicated region
      $region33: #{generator_forward.7} parent=27 // pred_check
        %p713 = pneg %p219
      $region34: #{generator_forward.7} parent=27 // pred_check_branch
        %715 = sbr.rel (%p713) target = $region36
      $region35: #{generator_forward.7} parent=27 // pred_region
        %v716 = vld [vmem:[#allocation2] sm:$0xff]
        %v717 = vld [vmem:[#allocation2 + $0x8] sm:$0xff]
        %v718 = vld [vmem:[#allocation2 + $0x10] sm:$0xff]
        %v719 = vld [vmem:[#allocation2 + $0x18] sm:$0xff]
        %v720 = vld [vmem:[#allocation2 + $0x20] sm:$0xff]
        %v721 = vld [vmem:[#allocation2 + $0x28] sm:$0xff]
        %v722 = vld [vmem:[#allocation2 + $0x30] sm:$0xff]
        %v723 = vld [vmem:[#allocation2 + $0x38] sm:$0xff]
        %v724 = vld [vmem:[#allocation2 + $0x40] sm:$0xff]
        %v725 = vld [vmem:[#allocation2 + $0x48] sm:$0xff]
        %v726 = vld [vmem:[#allocation2 + $0x50] sm:$0xff]
        %v727 = vld [vmem:[#allocation2 + $0x58] sm:$0xff]
        %v728 = vld [vmem:[#allocation2 + $0x60] sm:$0xff]
        %v729 = vld [vmem:[#allocation2 + $0x68] sm:$0xff]
        %v730 = vld [vmem:[#allocation2 + $0x70] sm:$0xff]
        %v731 = vld [vmem:[#allocation2 + $0x78] sm:$0xff]
        %v732 = vld [vmem:[#allocation2 + $0x80] sm:$0xff]
        %v733 = vld [vmem:[#allocation2 + $0x88] sm:$0xff]
        %v734 = vld [vmem:[#allocation2 + $0x90] sm:$0xff]
        %v735 = vld [vmem:[#allocation2 + $0x98] sm:$0xff]
        %v736 = vld [vmem:[#allocation2 + $0xa0] sm:$0xff]
        %v737 = vld [vmem:[#allocation2 + $0xa8] sm:$0xff]
        %v738 = vld [vmem:[#allocation2 + $0xb0] sm:$0xff]
        %v739 = vld [vmem:[#allocation2 + $0xb8] sm:$0xff]
        %v740 = vld [vmem:[#allocation2 + $0xc0] sm:$0xff]
        %v741 = vld [vmem:[#allocation2 + $0xc8] sm:$0xff]
        %v742 = vld [vmem:[#allocation2 + $0xd0] sm:$0xff]
        %v743 = vld [vmem:[#allocation2 + $0xd8] sm:$0xff]
        %v744 = vld [vmem:[#allocation2 + $0xe0] sm:$0xff]
        %v745 = vld [vmem:[#allocation2 + $0xe8] sm:$0xff]
        %v746 = vld [vmem:[#allocation2 + $0xf0] sm:$0xff]
        %v747 = vld [vmem:[#allocation2 + $0xf8] sm:$0xff]
        %748 = vst [vmem:[%s216] sm:$0xff] %v716
        %749 = vst [vmem:[%s216 + $0x8] sm:$0xff] %v717
        %750 = vst [vmem:[%s216 + $0x10] sm:$0xff] %v718
        %751 = vst [vmem:[%s216 + $0x18] sm:$0xff] %v719
        %752 = vst [vmem:[%s216 + $0x20] sm:$0xff] %v720
        %753 = vst [vmem:[%s216 + $0x28] sm:$0xff] %v721
        %754 = vst [vmem:[%s216 + $0x30] sm:$0xff] %v722
        %755 = vst [vmem:[%s216 + $0x38] sm:$0xff] %v723
        %756 = vst [vmem:[%s216 + $0x40] sm:$0xff] %v724
        %757 = vst [vmem:[%s216 + $0x48] sm:$0xff] %v725
        %758 = vst [vmem:[%s216 + $0x50] sm:$0xff] %v726
        %759 = vst [vmem:[%s216 + $0x58] sm:$0xff] %v727
        %760 = vst [vmem:[%s216 + $0x60] sm:$0xff] %v728
        %761 = vst [vmem:[%s216 + $0x68] sm:$0xff] %v729
        %762 = vst [vmem:[%s216 + $0x70] sm:$0xff] %v730
        %763 = vst [vmem:[%s216 + $0x78] sm:$0xff] %v731
        %764 = vst [vmem:[%s216 + $0x80] sm:$0xff] %v732
        %765 = vst [vmem:[%s216 + $0x88] sm:$0xff] %v733
        %766 = vst [vmem:[%s216 + $0x90] sm:$0xff] %v734
        %767 = vst [vmem:[%s216 + $0x98] sm:$0xff] %v735
        %768 = vst [vmem:[%s216 + $0xa0] sm:$0xff] %v736
        %769 = vst [vmem:[%s216 + $0xa8] sm:$0xff] %v737
        %770 = vst [vmem:[%s216 + $0xb0] sm:$0xff] %v738
        %771 = vst [vmem:[%s216 + $0xb8] sm:$0xff] %v739
        %772 = vst [vmem:[%s216 + $0xc0] sm:$0xff] %v740
        %773 = vst [vmem:[%s216 + $0xc8] sm:$0xff] %v741
        %774 = vst [vmem:[%s216 + $0xd0] sm:$0xff] %v742
        %775 = vst [vmem:[%s216 + $0xd8] sm:$0xff] %v743
        %776 = vst [vmem:[%s216 + $0xe0] sm:$0xff] %v744
        %777 = vst [vmem:[%s216 + $0xe8] sm:$0xff] %v745
        %778 = vst [vmem:[%s216 + $0xf0] sm:$0xff] %v746
        %779 = vst [vmem:[%s216 + $0xf8] sm:$0xff] %v747
      $region36: #{generator_forward.7} parent=27 // pred_fallthru
        _
      %s780 = smul.u32 32, %s18
      %p781 = scmp.lt.s32.totalorder %s780, 63
      %s782 = scalar_select %p781, %s780, 63
      %p783 = scmp.lt.s32.totalorder %s19, 0
      %s784 = scalar_select %p783, %s19, 0
      %s785 = sadd.s32 %s784, %s782
      %s786 = smul.addr %s785, 8
      %s787 = scalar_lea.vmem %s2, %s786
      // Predicated region
      $region37: #{generator_forward.7} parent=27 // pred_check
        %p788 = pneg %p108
      $region38: #{generator_forward.7} parent=27 // pred_check_branch
        %790 = sbr.rel (%p788) target = $region40
      $region39: #{generator_forward.7} parent=27 // pred_region
        %s791 = smul.u32 32, %s18
      $region40: #{generator_forward.7} parent=27 // pred_fallthru
        _
    $region28: #{generator_forward.7} parent=5 // pred_fallthru
      _
    %p792 = scmp.le.s32.totalorder 2, %s8
    // Predicated region
    $region41: #{generator_forward.7} parent=5 // pred_check
      %p793 = pneg %p792
    $region42: #{generator_forward.7} parent=5 // pred_check_branch
      %795 = sbr.rel (%p793) target = $region44
    $region43: #{generator_forward.7} parent=5 // pred_region
      %s796 = ssub.s32 %s8, 2
      // Predicated region
      $region45: #{generator_forward.7} parent=43 // pred_check
        %p797 = pneg %p114
      $region46: #{generator_forward.7} parent=43 // pred_check_branch
        %799 = sbr.rel (%p797) target = $region48
      $region47: #{generator_forward.7} parent=43 // pred_region
        %s800 = smul.u32 32, %s21
        %p801 = scmp.lt.s32.totalorder %s800, 63
        %s802 = scalar_select %p801, %s800, 63
        %p803 = scmp.lt.s32.totalorder %s22, 0
        %s804 = scalar_select %p803, %s22, 0
        %s805 = sadd.s32 %s804, %s802
        %s806 = smul.addr %s805, 8
        %s807 = scalar_lea.vmem %s2, %s806
      $region48: #{generator_forward.7} parent=43 // pred_fallthru
        _
    $region44: #{generator_forward.7} parent=5 // pred_fallthru
      _
  $region6: #{generator_forward.7} parent=0 // loop_footer
    %s12 = sadd.s32 1, %s8
  $region7: #{generator_forward.7} parent=0 // loop_footer_branch
    %7 = sbr.rel target = $region3
  $region8: #{generator_forward.7} parent=0 // loop_exit
    _

</llo_original>
